<compile_context>
chip_gen: v6e
topology: v6e:2x2x1
jax: 0.10.0
libtpu: 0.0.40
codegen_flags: <defaults>
</compile_context>

<pallas_src>
import functools

import jax
import jax.numpy as jnp
from jax import lax
from jax.experimental import pallas as pl
from jax.experimental.pallas import tpu as pltpu

LN_EPS = 1e-5


def _layernorm(x, gamma, beta):
    mu = jnp.mean(x, axis=-1, keepdims=True)
    var = jnp.mean((x - mu) ** 2, axis=-1, keepdims=True)
    return (x - mu) * lax.rsqrt(var + LN_EPS) * gamma + beta


def block_kernel(
    xq_ref,     # (1, TQ, C) f32   query rows of x (also the residual stream)
    xk_ref,     # (1, TK, C) f32   key/value rows of x
    wq_ref,     # (C, C)  bf16     fused Q projection, heads stacked on columns
    wk_ref,     # (C, C)  bf16
    wv_ref,     # (C, C)  bf16
    wproj_ref,  # (C, C)  bf16     attention output projection (in, out)
    bproj_ref,  # (1, C)  f32
    w1_ref,     # (C, 8C) bf16
    b1_ref,     # (1, 8C) f32
    w2_ref,     # (8C, C) bf16
    b2_ref,     # (1, C)  f32
    g1_ref,     # (1, C)  f32      LN1 gamma
    bln1_ref,   # (1, C)  f32      LN1 beta
    g2_ref,     # (1, C)  f32      LN2 gamma
    bln2_ref,   # (1, C)  f32      LN2 beta
    o_ref,      # (1, TQ, C) f32
    q_scr,      # (TQ, C) compute_dtype     scaled queries (persist across key tiles)
    k_cache,    # (T or TK, C) compute_dtype  projected keys (cache across query tiles)
    v_cache,    # (T or TK, C) compute_dtype  projected values
    m_scr,      # (H, TQ, 1) f32            running row max, per head
    l_scr,      # (H, TQ, 1) f32            running softmax denom, per head
    acc_scr,    # (TQ, C) f32               running PV accumulation (head lane slices)
    *,
    num_heads: int,
    compute_dtype,
    cache_kv: bool,
    tk: int,
):
    qi = pl.program_id(1)
    ki = pl.program_id(2)
    nk = pl.num_programs(2)

    C = xq_ref.shape[-1]
    head_size = C // num_heads
    scale = 1.0 / (float(head_size) ** 0.5)

    # ---- per (batch, query-tile) init: flash state + LN1 + fused Q projection ----
    @pl.when(ki == 0)
    def _init():
        m_scr[...] = jnp.full(m_scr.shape, -jnp.inf, dtype=m_scr.dtype)
        l_scr[...] = jnp.zeros(l_scr.shape, dtype=l_scr.dtype)
        acc_scr[...] = jnp.zeros(acc_scr.shape, dtype=acc_scr.dtype)
        hq = _layernorm(xq_ref[0], g1_ref[...], bln1_ref[...])
        q = jnp.dot(hq.astype(compute_dtype), wq_ref[...],
                    preferred_element_type=jnp.float32)              # (TQ, C)
        q_scr[...] = (q * scale).astype(compute_dtype)

    # ---- K/V for this key tile: LN1 + fused lane-dense (C, C) projections ----
    def _project_kv(row_start):
        hk = _layernorm(xk_ref[0], g1_ref[...], bln1_ref[...]).astype(compute_dtype)
        k = jnp.dot(hk, wk_ref[...], preferred_element_type=jnp.float32)   # (TK, C)
        v = jnp.dot(hk, wv_ref[...], preferred_element_type=jnp.float32)   # (TK, C)
        k_cache[pl.ds(row_start, tk), :] = k.astype(compute_dtype)
        v_cache[pl.ds(row_start, tk), :] = v.astype(compute_dtype)

    if cache_kv:
        row_start = pl.multiple_of(ki * tk, tk)

        @pl.when(qi == 0)
        def _fill_cache():
            _project_kv(row_start)
    else:
        row_start = 0
        _project_kv(0)

    k_all = k_cache[pl.ds(row_start, tk), :]                          # (TK, C) bf16
    v_all = v_cache[pl.ds(row_start, tk), :]                          # (TK, C) bf16

    # ---- per-head online softmax over this key tile (f32 softmax math) ----
    for h in range(num_heads):
        sl = slice(h * head_size, (h + 1) * head_size)
        q_h = q_scr[:, sl]                                            # (TQ, hs) bf16
        s = lax.dot_general(q_h, k_all[:, sl],
                            (((1,), (1,)), ((), ())),
                            preferred_element_type=jnp.float32)       # (TQ, TK) f32
        m_prev = m_scr[h]                                             # (TQ, 1)
        m_new = jnp.maximum(m_prev, jnp.max(s, axis=-1, keepdims=True))
        alpha = jnp.exp(m_prev - m_new)                               # (TQ, 1)
        p = jnp.exp(s - m_new)                                        # (TQ, TK) f32
        l_scr[h] = alpha * l_scr[h] + jnp.sum(p, axis=-1, keepdims=True)
        pv = jnp.dot(p.astype(compute_dtype), v_all[:, sl],
                     preferred_element_type=jnp.float32)              # (TQ, hs)
        acc_scr[:, sl] = alpha * acc_scr[:, sl] + pv
        m_scr[h] = m_new

    # ---- after the last key tile: proj + residual + LN2 + MLP + residual ----
    @pl.when(ki == nk - 1)
    def _finalize():
        for h in range(num_heads):
            sl = slice(h * head_size, (h + 1) * head_size)
            inv_l = pl.reciprocal(l_scr[h], approx=True)              # (TQ, 1)
            acc_scr[:, sl] = acc_scr[:, sl] * inv_l
        cat = acc_scr[...].astype(compute_dtype)                      # (TQ, C), no concat
        sa = jnp.dot(cat, wproj_ref[...],
                     preferred_element_type=jnp.float32) + bproj_ref[...]
        x1 = xq_ref[0] + sa                                           # residual 1 (f32)

        h2 = _layernorm(x1, g2_ref[...], bln2_ref[...]).astype(compute_dtype)
        ff = jnp.dot(h2, w1_ref[...],
                     preferred_element_type=jnp.float32) + b1_ref[...]
        ff = jnp.maximum(ff, 0.0).astype(compute_dtype)
        ff = jnp.dot(ff, w2_ref[...],
                     preferred_element_type=jnp.float32) + b2_ref[...]
        o_ref[0] = x1 + ff                                            # residual 2


def transformer_block(x, params, *, tq=128, tk=128, matmul_dtype=jnp.bfloat16,
                      kv_cache_budget_bytes=16 << 20):
    """x: (B, T, C) float32. params: dict of per-head / linear weights (see init_params)."""
    B, T, C = x.shape
    H, _, hs = params["wq"].shape
    assert H * hs == C

    tq = min(tq, T)
    tk = min(tk, T)
    assert T % tq == 0 and (tq % 8 == 0 or tq == T), "query tile must be 8-aligned"
    assert T % tk == 0 and (tk % 8 == 0 or tk == T), "key tile must be 8-aligned"
    nq, nk = T // tq, T // tk

    dt_bytes = jnp.dtype(matmul_dtype).itemsize
    kv_cache_bytes = 2 * T * C * dt_bytes
    # Cache the projected K/V across query tiles when there is anything to reuse
    # and the cache fits a conservative VMEM budget.
    cache_kv = (nq > 1) and (kv_cache_bytes <= kv_cache_budget_bytes)

    # Fuse per-head projections into lane-dense (C, C) matmuls:
    # (H, C, hs) -> (C, H*hs) with head-major columns (matches torch.cat ordering).
    def fuse(w):
        return jnp.transpose(w, (1, 0, 2)).reshape(C, C).astype(matmul_dtype)

    weights = [
        fuse(params["wq"]), fuse(params["wk"]), fuse(params["wv"]),
        params["wproj"].astype(matmul_dtype),
        params["bproj"].astype(jnp.float32),
        params["w1"].astype(matmul_dtype),
        params["b1"].astype(jnp.float32),
        params["w2"].astype(matmul_dtype),
        params["b2"].astype(jnp.float32),
        params["ln1_g"].astype(jnp.float32),
        params["ln1_b"].astype(jnp.float32),
        params["ln2_g"].astype(jnp.float32),
        params["ln2_b"].astype(jnp.float32),
    ]

    def _const_spec(arr):
        zeros = (0,) * arr.ndim
        # Constant index_map: the pipeline keeps the block resident and skips
        # re-DMA when the block index does not change between grid steps.
        return pl.BlockSpec(arr.shape, lambda b, qi, ki, _z=zeros: _z)

    if cache_kv:
        # Key rows are only consumed while filling the cache (qi == 0); afterwards the
        # block index stays constant so the pipeline skips the redundant HBM re-reads.
        xk_index = lambda b, qi, ki: (b, jnp.where(qi == 0, ki, 0), 0)
    else:
        xk_index = lambda b, qi, ki: (b, ki, 0)

    in_specs = [
        pl.BlockSpec((1, tq, C), lambda b, qi, ki: (b, qi, 0)),   # query rows of x
        pl.BlockSpec((1, tk, C), xk_index),                        # key/value rows of x
    ] + [_const_spec(w) for w in weights]
    out_spec = pl.BlockSpec((1, tq, C), lambda b, qi, ki: (b, qi, 0))

    kv_rows = T if cache_kv else tk
    scratch_shapes = [
        pltpu.VMEM((tq, C), matmul_dtype),         # scaled Q
        pltpu.VMEM((kv_rows, C), matmul_dtype),    # projected K (cache across q tiles)
        pltpu.VMEM((kv_rows, C), matmul_dtype),    # projected V
        pltpu.VMEM((H, tq, 1), jnp.float32),       # running max
        pltpu.VMEM((H, tq, 1), jnp.float32),       # running softmax denom
        pltpu.VMEM((tq, C), jnp.float32),          # PV accumulator (lane slices per head)
    ]

    # Explicit scoped-VMEM budget: resident weights + double-buffered activation
    # tiles + scratch (incl. K/V cache), with headroom; capped at v7x's 64 MiB VMEM.
    def nbytes(a):
        return a.size * jnp.dtype(a.dtype).itemsize

    weight_bytes = sum(nbytes(w) for w in weights)
    act_bytes = 4 * C * (tq + tk + tq)                      # xq, xk, out blocks (f32)
    scr_bytes = (tq * C) * (dt_bytes + 4) + 2 * H * tq * 4 + 2 * kv_rows * C * dt_bytes
    vmem_limit = 2 * (weight_bytes + act_bytes) + scr_bytes + (8 << 20)
    vmem_limit = int(min(max(vmem_limit, 32 << 20), 64 << 20))

    kernel = functools.partial(block_kernel, num_heads=H, compute_dtype=matmul_dtype,
                               cache_kv=cache_kv, tk=tk)

    dim_sem = ("parallel", "arbitrary", "arbitrary") if cache_kv \
        else ("parallel", "parallel", "arbitrary")

    return pl.pallas_call(
        kernel,
        out_shape=jax.ShapeDtypeStruct((B, T, C), jnp.float32),
        grid_spec=pltpu.PrefetchScalarGridSpec(
            num_scalar_prefetch=0,
            grid=(B, nq, nk),
            in_specs=in_specs,
            out_specs=out_spec,
            scratch_shapes=scratch_shapes,
        ),
        compiler_params=pltpu.CompilerParams(
            dimension_semantics=dim_sem,
            vmem_limit_bytes=vmem_limit,
        ),
    )(x, x, *weights)


def init_params(key, n_embd, n_head):
    """Deterministic synthetic parameters mirroring Block.__init__ shapes (f32)."""
    head_size = n_embd // n_head
    ks = jax.random.split(key, 10)
    kaiming_std = (2.0 / n_embd) ** 0.5
    lin_std = 1.0 / (n_embd ** 0.5)

    return {
        # per-head attention weights, stacked (H, C, hs)
        "wq": jax.random.normal(ks[0], (n_head, n_embd, head_size), jnp.float32) * kaiming_std,
        "wk": jax.random.normal(ks[1], (n_head, n_embd, head_size), jnp.float32) * kaiming_std,
        "wv": jax.random.normal(ks[2], (n_head, n_embd, head_size), jnp.float32) * kaiming_std,
        # MultiHeadAttention.proj : Linear(C, C), stored as (in, out)
        "wproj": jax.random.normal(ks[3], (n_embd, n_embd), jnp.float32) * lin_std,
        "bproj": jax.random.normal(ks[4], (1, n_embd), jnp.float32) * lin_std,
        # FeedFoward: Linear(C, 8C) -> ReLU -> Linear(8C, C), (in, out) layout
        "w1": jax.random.normal(ks[5], (n_embd, 8 * n_embd), jnp.float32) * lin_std,
        "b1": jax.random.normal(ks[6], (1, 8 * n_embd), jnp.float32) * lin_std,
        "w2": jax.random.normal(ks[7], (8 * n_embd, n_embd), jnp.float32) * (1.0 / (8 * n_embd) ** 0.5),
        "b2": jax.random.normal(ks[8], (1, n_embd), jnp.float32) * (1.0 / (8 * n_embd) ** 0.5),
        # LayerNorms: default init
        "ln1_g": jnp.ones((1, n_embd), jnp.float32),
        "ln1_b": jnp.zeros((1, n_embd), jnp.float32),
        "ln2_g": jnp.ones((1, n_embd), jnp.float32),
        "ln2_b": jnp.zeros((1, n_embd), jnp.float32),
    }


def reference_block(x, p, matmul_dtype=jnp.float32):
    """Pure-JAX reference matching the PyTorch forward (eval mode).

    matmul_dtype=bf16 emulates the kernel's bf16 matmul operands (f32 accumulate)
    for a tight implementation check; f32 gives the exact PyTorch semantics.
    """
    dt = matmul_dtype

    def mm(a, b):
        return jnp.einsum("...ij,jk->...ik", a.astype(dt), b.astype(dt),
                          preferred_element_type=jnp.float32)

    def ln(v, g, b):
        mu = jnp.mean(v, axis=-1, keepdims=True)
        var = jnp.mean((v - mu) ** 2, axis=-1, keepdims=True)
        return (v - mu) / jnp.sqrt(var + LN_EPS) * g + b

    h = ln(x, p["ln1_g"], p["ln1_b"])
    H, _, hs = p["wq"].shape
    outs = []
    for i in range(H):
        q = mm(h, p["wq"][i])
        k = mm(h, p["wk"][i])
        v = mm(h, p["wv"][i])
        s = jnp.einsum("...qd,...kd->...qk", (q / hs ** 0.5).astype(dt), k.astype(dt),
                       preferred_element_type=jnp.float32)
        pr = jax.nn.softmax(s, axis=-1)
        outs.append(jnp.einsum("...qk,...kd->...qd", pr.astype(dt), v.astype(dt),
                               preferred_element_type=jnp.float32))
    cat = jnp.concatenate(outs, axis=-1)
    sa = mm(cat, p["wproj"]) + p["bproj"]
    x1 = x + sa
    h2 = ln(x1, p["ln2_g"], p["ln2_b"])
    ff = jnp.maximum(mm(h2, p["w1"]) + p["b1"], 0.0)
    ff = mm(ff, p["w2"]) + p["b2"]
    return x1 + ff


if __name__ == "__main__":
    B, T = 2, 16
    n_embd, n_head = 32, 4

    key = jax.random.PRNGKey(0)
    kx, kp = jax.random.split(key)
    x = jax.random.normal(kx, (B, T, n_embd), jnp.float32)
    params = init_params(kp, n_embd, n_head)

    ref_bf16 = reference_block(x, params, matmul_dtype=jnp.bfloat16)
    ref_f32 = reference_block(x, params, matmul_dtype=jnp.float32)

    # Config 1: multiple query tiles + multiple key tiles -> exercises the K/V cache
    # path and online-softmax accumulation (grid = (2, 2, 2)).
    # Config 2: single query tile, two key tiles -> exercises the recompute path.
    for (tq, tk) in [(8, 8), (16, 8)]:
        out = jax.block_until_ready(transformer_block(x, params, tq=tq, tk=tk))
        assert out.shape == (B, T, n_embd)
        assert bool(jnp.all(jnp.isfinite(out)))

        # Implementation check: reference with bf16 matmul operands (f32 accumulate).
        err_impl = float(jnp.max(jnp.abs(out - ref_bf16)))
        assert jnp.allclose(out, ref_bf16, atol=5e-2, rtol=5e-2), (tq, tk, err_impl)

        # Semantics check: exact f32 PyTorch-equivalent reference (looser tolerance
        # because the kernel intentionally uses bf16 matmul operands).
        err_sem = float(jnp.max(jnp.abs(out - ref_f32)))
        assert jnp.allclose(out, ref_f32, atol=2.5e-1, rtol=1e-1), (tq, tk, err_sem)

    print("KERNEL_OK")
</pallas_src>

<mosaic_0001>
module attributes {stable_mosaic.version = 11 : i64} {
  func.func @block_kernel(%arg0: i32, %arg1: i32, %arg2: i32, %arg3: memref<1x8x32xf32, #tpu.memory_space<vmem>>, %arg4: memref<1x8x32xf32, #tpu.memory_space<vmem>>, %arg5: memref<32x32xbf16, #tpu.memory_space<vmem>>, %arg6: memref<32x32xbf16, #tpu.memory_space<vmem>>, %arg7: memref<32x32xbf16, #tpu.memory_space<vmem>>, %arg8: memref<32x32xbf16, #tpu.memory_space<vmem>>, %arg9: memref<1x32xf32, #tpu.memory_space<vmem>>, %arg10: memref<32x256xbf16, #tpu.memory_space<vmem>>, %arg11: memref<1x256xf32, #tpu.memory_space<vmem>>, %arg12: memref<256x32xbf16, #tpu.memory_space<vmem>>, %arg13: memref<1x32xf32, #tpu.memory_space<vmem>>, %arg14: memref<1x32xf32, #tpu.memory_space<vmem>>, %arg15: memref<1x32xf32, #tpu.memory_space<vmem>>, %arg16: memref<1x32xf32, #tpu.memory_space<vmem>>, %arg17: memref<1x32xf32, #tpu.memory_space<vmem>>, %arg18: memref<1x8x32xf32, #tpu.memory_space<vmem>>, %arg19: memref<8x32xbf16, #tpu.memory_space<vmem>>, %arg20: memref<16x32xbf16, #tpu.memory_space<vmem>>, %arg21: memref<16x32xbf16, #tpu.memory_space<vmem>>, %arg22: memref<4x8x1xf32, #tpu.memory_space<vmem>>, %arg23: memref<4x8x1xf32, #tpu.memory_space<vmem>>, %arg24: memref<8x32xf32, #tpu.memory_space<vmem>>) attributes {dimension_semantics = [#tpu.dimension_semantics<parallel>, #tpu.dimension_semantics<arbitrary>, #tpu.dimension_semantics<arbitrary>], iteration_bounds = array<i64: 2, 2, 2>, scalar_prefetch = 0 : i64, scratch_operands = 6 : i64, tpu.core_type = #tpu.core_type<tc>, window_params = [{transform_indices = @transform_0, window_bounds = array<i64: 1, 8, 32>}, {transform_indices = @transform_1, window_bounds = array<i64: 1, 8, 32>}, {pipeline_mode = #tpu.pipeline_mode<synchronous>, transform_indices = @transform_2, window_bounds = array<i64: 32, 32>}, {pipeline_mode = #tpu.pipeline_mode<synchronous>, transform_indices = @transform_3, window_bounds = array<i64: 32, 32>}, {pipeline_mode = #tpu.pipeline_mode<synchronous>, transform_indices = @transform_4, window_bounds = array<i64: 32, 32>}, {pipeline_mode = #tpu.pipeline_mode<synchronous>, transform_indices = @transform_5, window_bounds = array<i64: 32, 32>}, {pipeline_mode = #tpu.pipeline_mode<synchronous>, transform_indices = @transform_6, window_bounds = array<i64: 1, 32>}, {pipeline_mode = #tpu.pipeline_mode<synchronous>, transform_indices = @transform_7, window_bounds = array<i64: 32, 256>}, {pipeline_mode = #tpu.pipeline_mode<synchronous>, transform_indices = @transform_8, window_bounds = array<i64: 1, 256>}, {pipeline_mode = #tpu.pipeline_mode<synchronous>, transform_indices = @transform_9, window_bounds = array<i64: 256, 32>}, {pipeline_mode = #tpu.pipeline_mode<synchronous>, transform_indices = @transform_10, window_bounds = array<i64: 1, 32>}, {pipeline_mode = #tpu.pipeline_mode<synchronous>, transform_indices = @transform_11, window_bounds = array<i64: 1, 32>}, {pipeline_mode = #tpu.pipeline_mode<synchronous>, transform_indices = @transform_12, window_bounds = array<i64: 1, 32>}, {pipeline_mode = #tpu.pipeline_mode<synchronous>, transform_indices = @transform_13, window_bounds = array<i64: 1, 32>}, {pipeline_mode = #tpu.pipeline_mode<synchronous>, transform_indices = @transform_14, window_bounds = array<i64: 1, 32>}, {transform_indices = @transform_15, window_bounds = array<i64: 1, 8, 32>}]} {
    %c0_i32 = arith.constant 0 : i32
    %0 = arith.cmpi eq, %arg2, %c0_i32 : i32
    %1 = arith.extui %0 : i1 to i32
    %c0_i32_0 = arith.constant 0 : i32
    %2 = arith.cmpi ne, %1, %c0_i32_0 : i32
    scf.if %2 {
      %cst_86 = arith.constant 0xFF800000 : f32
      %147 = vector.broadcast %cst_86 : f32 to vector<4x8x1xf32>
      %c0_87 = arith.constant 0 : index
      %c0_88 = arith.constant 0 : index
      %c0_89 = arith.constant 0 : index
      %148 = vector.load %arg22[%c0_87, %c0_88, %c0_89] : memref<4x8x1xf32, #tpu.memory_space<vmem>>, vector<4x8x1xf32>
      tpu.vector_store %arg22[%c0_87, %c0_88, %c0_89], %147 {strides = array<i32>} : memref<4x8x1xf32, #tpu.memory_space<vmem>>, vector<4x8x1xf32>,
      %cst_90 = arith.constant 0.000000e+00 : f32
      %149 = vector.broadcast %cst_90 : f32 to vector<4x8x1xf32>
      %c0_91 = arith.constant 0 : index
      %c0_92 = arith.constant 0 : index
      %c0_93 = arith.constant 0 : index
      %150 = vector.load %arg23[%c0_91, %c0_92, %c0_93] : memref<4x8x1xf32, #tpu.memory_space<vmem>>, vector<4x8x1xf32>
      tpu.vector_store %arg23[%c0_91, %c0_92, %c0_93], %149 {strides = array<i32>} : memref<4x8x1xf32, #tpu.memory_space<vmem>>, vector<4x8x1xf32>,
      %cst_94 = arith.constant 0.000000e+00 : f32
      %151 = vector.broadcast %cst_94 : f32 to vector<8x32xf32>
      %c0_95 = arith.constant 0 : index
      %c0_96 = arith.constant 0 : index
      %152 = vector.load %arg24[%c0_95, %c0_96] : memref<8x32xf32, #tpu.memory_space<vmem>>, vector<8x32xf32>
      tpu.vector_store %arg24[%c0_95, %c0_96], %151 {strides = array<i32>} : memref<8x32xf32, #tpu.memory_space<vmem>>, vector<8x32xf32>,
      %c0_97 = arith.constant 0 : index
      %c0_98 = arith.constant 0 : index
      %c0_99 = arith.constant 0 : index
      %153 = vector.load %arg3[%c0_97, %c0_98, %c0_99] : memref<1x8x32xf32, #tpu.memory_space<vmem>>, vector<1x8x32xf32>
      %154 = vector.shape_cast %153 : vector<1x8x32xf32> to vector<8x32xf32>
      %c0_100 = arith.constant 0 : index
      %c0_101 = arith.constant 0 : index
      %155 = vector.load %arg14[%c0_100, %c0_101] : memref<1x32xf32, #tpu.memory_space<vmem>>, vector<1x32xf32>
      %c0_102 = arith.constant 0 : index
      %c0_103 = arith.constant 0 : index
      %156 = vector.load %arg15[%c0_102, %c0_103] : memref<1x32xf32, #tpu.memory_space<vmem>>, vector<1x32xf32>
      %cst_104 = arith.constant dense<0.000000e+00> : vector<8xf32>
      %157 = vector.multi_reduction <add>, %154, %cst_104 [1] : vector<8x32xf32> to vector<8xf32>
      %158 = vector.shape_cast %157 : vector<8xf32> to vector<8x1xf32>
      %cst_105 = arith.constant 3.200000e+01 : f32
      %159 = vector.broadcast %cst_105 : f32 to vector<8x1xf32>
      %160 = arith.divf %158, %159 : vector<8x1xf32>
      %161 = vector.broadcast %160 : vector<8x1xf32> to vector<8x32xf32>
      %162 = arith.subf %154, %161 : vector<8x32xf32>
      %163 = arith.mulf %162, %162 : vector<8x32xf32>
      %cst_106 = arith.constant dense<0.000000e+00> : vector<8xf32>
      %164 = vector.multi_reduction <add>, %163, %cst_106 [1] : vector<8x32xf32> to vector<8xf32>
      %165 = vector.shape_cast %164 : vector<8xf32> to vector<8x1xf32>
      %cst_107 = arith.constant 3.200000e+01 : f32
      %166 = vector.broadcast %cst_107 : f32 to vector<8x1xf32>
      %167 = arith.divf %165, %166 : vector<8x1xf32>
      %168 = vector.broadcast %160 : vector<8x1xf32> to vector<8x32xf32>
      %169 = arith.subf %154, %168 : vector<8x32xf32>
      %cst_108 = arith.constant 9.99999974E-6 : f32
      %170 = vector.broadcast %cst_108 : f32 to vector<8x1xf32>
      %171 = arith.addf %167, %170 : vector<8x1xf32>
      %172 = math.rsqrt %171 : vector<8x1xf32>
      %173 = vector.broadcast %172 : vector<8x1xf32> to vector<8x32xf32>
      %174 = arith.mulf %169, %173 : vector<8x32xf32>
      %175 = vector.broadcast %155 : vector<1x32xf32> to vector<8x32xf32>
      %176 = arith.mulf %174, %175 : vector<8x32xf32>
      %177 = vector.broadcast %156 : vector<1x32xf32> to vector<8x32xf32>
      %178 = arith.addf %176, %177 : vector<8x32xf32>
      %179 = arith.truncf %178 : vector<8x32xf32> to vector<8x32xbf16>
      %c0_109 = arith.constant 0 : index
      %c0_110 = arith.constant 0 : index
      %180 = vector.load %arg5[%c0_109, %c0_110] : memref<32x32xbf16, #tpu.memory_space<vmem>>, vector<32x32xbf16>
      %cst_111 = arith.constant dense<0.000000e+00> : vector<8x32xf32>
      %181 = tpu.matmul %179, %180, %cst_111 {dimension_numbers = #tpu.dot_dimension_numbers<[1], [0], [0], [1], [0, 0, 1, 1], [], []>} : vector<8x32xbf16>, vector<32x32xbf16>, vector<8x32xf32> -> vector<8x32xf32>
      %cst_112 = arith.constant 0.353553385 : f32
      %182 = vector.broadcast %cst_112 : f32 to vector<8x32xf32>
      %183 = arith.mulf %181, %182 : vector<8x32xf32>
      %184 = arith.truncf %183 : vector<8x32xf32> to vector<8x32xbf16>
      %c0_113 = arith.constant 0 : index
      %c0_114 = arith.constant 0 : index
      %185 = vector.load %arg19[%c0_113, %c0_114] : memref<8x32xbf16, #tpu.memory_space<vmem>>, vector<8x32xbf16>
      tpu.vector_store %arg19[%c0_113, %c0_114], %184 {strides = array<i32>} : memref<8x32xbf16, #tpu.memory_space<vmem>>, vector<8x32xbf16>,
    } else {
    }
    %c8_i32 = arith.constant 8 : i32
    %3 = arith.muli %arg2, %c8_i32 : i32
    %4 = tpu.assume_multiple %3, 8 : i32
    %c0_i32_1 = arith.constant 0 : i32
    %5 = arith.cmpi eq, %arg1, %c0_i32_1 : i32
    %6 = arith.extui %5 : i1 to i32
    %c0_i32_2 = arith.constant 0 : i32
    %7 = arith.cmpi ne, %6, %c0_i32_2 : i32
    scf.if %7 {
      %c0_86 = arith.constant 0 : index
      %c0_87 = arith.constant 0 : index
      %c0_88 = arith.constant 0 : index
      %147 = vector.load %arg4[%c0_86, %c0_87, %c0_88] : memref<1x8x32xf32, #tpu.memory_space<vmem>>, vector<1x8x32xf32>
      %148 = vector.shape_cast %147 : vector<1x8x32xf32> to vector<8x32xf32>
      %c0_89 = arith.constant 0 : index
      %c0_90 = arith.constant 0 : index
      %149 = vector.load %arg14[%c0_89, %c0_90] : memref<1x32xf32, #tpu.memory_space<vmem>>, vector<1x32xf32>
      %c0_91 = arith.constant 0 : index
      %c0_92 = arith.constant 0 : index
      %150 = vector.load %arg15[%c0_91, %c0_92] : memref<1x32xf32, #tpu.memory_space<vmem>>, vector<1x32xf32>
      %cst_93 = arith.constant dense<0.000000e+00> : vector<8xf32>
      %151 = vector.multi_reduction <add>, %148, %cst_93 [1] : vector<8x32xf32> to vector<8xf32>
      %152 = vector.shape_cast %151 : vector<8xf32> to vector<8x1xf32>
      %cst_94 = arith.constant 3.200000e+01 : f32
      %153 = vector.broadcast %cst_94 : f32 to vector<8x1xf32>
      %154 = arith.divf %152, %153 : vector<8x1xf32>
      %155 = vector.broadcast %154 : vector<8x1xf32> to vector<8x32xf32>
      %156 = arith.subf %148, %155 : vector<8x32xf32>
      %157 = arith.mulf %156, %156 : vector<8x32xf32>
      %cst_95 = arith.constant dense<0.000000e+00> : vector<8xf32>
      %158 = vector.multi_reduction <add>, %157, %cst_95 [1] : vector<8x32xf32> to vector<8xf32>
      %159 = vector.shape_cast %158 : vector<8xf32> to vector<8x1xf32>
      %cst_96 = arith.constant 3.200000e+01 : f32
      %160 = vector.broadcast %cst_96 : f32 to vector<8x1xf32>
      %161 = arith.divf %159, %160 : vector<8x1xf32>
      %162 = vector.broadcast %154 : vector<8x1xf32> to vector<8x32xf32>
      %163 = arith.subf %148, %162 : vector<8x32xf32>
      %cst_97 = arith.constant 9.99999974E-6 : f32
      %164 = vector.broadcast %cst_97 : f32 to vector<8x1xf32>
      %165 = arith.addf %161, %164 : vector<8x1xf32>
      %166 = math.rsqrt %165 : vector<8x1xf32>
      %167 = vector.broadcast %166 : vector<8x1xf32> to vector<8x32xf32>
      %168 = arith.mulf %163, %167 : vector<8x32xf32>
      %169 = vector.broadcast %149 : vector<1x32xf32> to vector<8x32xf32>
      %170 = arith.mulf %168, %169 : vector<8x32xf32>
      %171 = vector.broadcast %150 : vector<1x32xf32> to vector<8x32xf32>
      %172 = arith.addf %170, %171 : vector<8x32xf32>
      %173 = arith.truncf %172 : vector<8x32xf32> to vector<8x32xbf16>
      %c0_98 = arith.constant 0 : index
      %c0_99 = arith.constant 0 : index
      %174 = vector.load %arg6[%c0_98, %c0_99] : memref<32x32xbf16, #tpu.memory_space<vmem>>, vector<32x32xbf16>
      %cst_100 = arith.constant dense<0.000000e+00> : vector<8x32xf32>
      %175 = tpu.matmul %173, %174, %cst_100 {dimension_numbers = #tpu.dot_dimension_numbers<[1], [0], [0], [1], [0, 0, 1, 1], [], []>} : vector<8x32xbf16>, vector<32x32xbf16>, vector<8x32xf32> -> vector<8x32xf32>
      %c0_101 = arith.constant 0 : index
      %c0_102 = arith.constant 0 : index
      %176 = vector.load %arg7[%c0_101, %c0_102] : memref<32x32xbf16, #tpu.memory_space<vmem>>, vector<32x32xbf16>
      %cst_103 = arith.constant dense<0.000000e+00> : vector<8x32xf32>
      %177 = tpu.matmul %173, %176, %cst_103 {dimension_numbers = #tpu.dot_dimension_numbers<[1], [0], [0], [1], [0, 0, 1, 1], [], []>} : vector<8x32xbf16>, vector<32x32xbf16>, vector<8x32xf32> -> vector<8x32xf32>
      %178 = arith.truncf %175 : vector<8x32xf32> to vector<8x32xbf16>
      %179 = arith.index_cast %4 : i32 to index
      %c0_104 = arith.constant 0 : index
      %180 = vector.load %arg20[%179, %c0_104] : memref<16x32xbf16, #tpu.memory_space<vmem>>, vector<8x32xbf16>
      tpu.vector_store %arg20[%179, %c0_104], %178 {strides = array<i32>} : memref<16x32xbf16, #tpu.memory_space<vmem>>, vector<8x32xbf16>,
      %181 = arith.truncf %177 : vector<8x32xf32> to vector<8x32xbf16>
      %182 = arith.index_cast %4 : i32 to index
      %c0_105 = arith.constant 0 : index
      %183 = vector.load %arg21[%182, %c0_105] : memref<16x32xbf16, #tpu.memory_space<vmem>>, vector<8x32xbf16>
      tpu.vector_store %arg21[%182, %c0_105], %181 {strides = array<i32>} : memref<16x32xbf16, #tpu.memory_space<vmem>>, vector<8x32xbf16>,
    } else {
    }
    %8 = arith.index_cast %4 : i32 to index
    %c0 = arith.constant 0 : index
    %9 = vector.load %arg20[%8, %c0] : memref<16x32xbf16, #tpu.memory_space<vmem>>, vector<8x32xbf16>
    %10 = arith.index_cast %4 : i32 to index
    %c0_3 = arith.constant 0 : index
    %11 = vector.load %arg21[%10, %c0_3] : memref<16x32xbf16, #tpu.memory_space<vmem>>, vector<8x32xbf16>
    %c0_4 = arith.constant 0 : index
    %c0_5 = arith.constant 0 : index
    %12 = vector.load %arg19[%c0_4, %c0_5] : memref<8x32xbf16, #tpu.memory_space<vmem>>, vector<8x8xbf16>
    %13 = vector.extract_strided_slice %9 {offsets = [0, 0], sizes = [8, 8], strides = [1, 1]} : vector<8x32xbf16> to vector<8x8xbf16>
    %cst = arith.constant dense<0.000000e+00> : vector<8x8xf32>
    %14 = tpu.matmul %12, %13, %cst {dimension_numbers = #tpu.dot_dimension_numbers<[1], [1], [0], [0], [0, 0, 1, 0], [], []>} : vector<8x8xbf16>, vector<8x8xbf16>, vector<8x8xf32> -> vector<8x8xf32>
    %c0_6 = arith.constant 0 : index
    %c0_7 = arith.constant 0 : index
    %c0_8 = arith.constant 0 : index
    %15 = vector.load %arg22[%c0_6, %c0_7, %c0_8] : memref<4x8x1xf32, #tpu.memory_space<vmem>>, vector<1x8x1xf32>
    %16 = vector.shape_cast %15 : vector<1x8x1xf32> to vector<8x1xf32>
    %cst_9 = arith.constant dense<0xFF800000> : vector<8xf32>
    %17 = vector.multi_reduction <maximumf>, %14, %cst_9 [1] : vector<8x8xf32> to vector<8xf32>
    %18 = vector.shape_cast %17 : vector<8xf32> to vector<8x1xf32>
    %19 = arith.maximumf %16, %18 : vector<8x1xf32>
    %20 = arith.subf %16, %19 : vector<8x1xf32>
    %21 = math.exp %20 : vector<8x1xf32>
    %22 = vector.broadcast %19 : vector<8x1xf32> to vector<8x8xf32>
    %23 = arith.subf %14, %22 : vector<8x8xf32>
    %24 = math.exp %23 : vector<8x8xf32>
    %c0_10 = arith.constant 0 : index
    %c0_11 = arith.constant 0 : index
    %c0_12 = arith.constant 0 : index
    %25 = vector.load %arg23[%c0_10, %c0_11, %c0_12] : memref<4x8x1xf32, #tpu.memory_space<vmem>>, vector<1x8x1xf32>
    %26 = vector.shape_cast %25 : vector<1x8x1xf32> to vector<8x1xf32>
    %27 = arith.mulf %21, %26 : vector<8x1xf32>
    %cst_13 = arith.constant dense<0.000000e+00> : vector<8xf32>
    %28 = vector.multi_reduction <add>, %24, %cst_13 [1] : vector<8x8xf32> to vector<8xf32>
    %29 = vector.shape_cast %28 : vector<8xf32> to vector<8x1xf32>
    %30 = arith.addf %27, %29 : vector<8x1xf32>
    %c0_14 = arith.constant 0 : index
    %c0_15 = arith.constant 0 : index
    %c0_16 = arith.constant 0 : index
    %31 = vector.load %arg23[%c0_14, %c0_15, %c0_16] : memref<4x8x1xf32, #tpu.memory_space<vmem>>, vector<1x8x1xf32>
    %32 = vector.shape_cast %31 : vector<1x8x1xf32> to vector<8x1xf32>
    %33 = vector.shape_cast %30 : vector<8x1xf32> to vector<1x8x1xf32>
    tpu.vector_store %arg23[%c0_14, %c0_15, %c0_16], %33 {strides = array<i32>} : memref<4x8x1xf32, #tpu.memory_space<vmem>>, vector<1x8x1xf32>,
    %34 = arith.truncf %24 : vector<8x8xf32> to vector<8x8xbf16>
    %35 = vector.extract_strided_slice %11 {offsets = [0, 0], sizes = [8, 8], strides = [1, 1]} : vector<8x32xbf16> to vector<8x8xbf16>
    %cst_17 = arith.constant dense<0.000000e+00> : vector<8x8xf32>
    %36 = tpu.matmul %34, %35, %cst_17 {dimension_numbers = #tpu.dot_dimension_numbers<[1], [0], [0], [1], [0, 0, 1, 1], [], []>} : vector<8x8xbf16>, vector<8x8xbf16>, vector<8x8xf32> -> vector<8x8xf32>
    %c0_18 = arith.constant 0 : index
    %c0_19 = arith.constant 0 : index
    %37 = vector.load %arg24[%c0_18, %c0_19] : memref<8x32xf32, #tpu.memory_space<vmem>>, vector<8x8xf32>
    %38 = vector.broadcast %21 : vector<8x1xf32> to vector<8x8xf32>
    %39 = arith.mulf %38, %37 : vector<8x8xf32>
    %40 = arith.addf %39, %36 : vector<8x8xf32>
    %c0_20 = arith.constant 0 : index
    %c0_21 = arith.constant 0 : index
    %41 = vector.load %arg24[%c0_20, %c0_21] : memref<8x32xf32, #tpu.memory_space<vmem>>, vector<8x8xf32>
    tpu.vector_store %arg24[%c0_20, %c0_21], %40 {strides = array<i32>} : memref<8x32xf32, #tpu.memory_space<vmem>>, vector<8x8xf32>,
    %c0_22 = arith.constant 0 : index
    %c0_23 = arith.constant 0 : index
    %c0_24 = arith.constant 0 : index
    %42 = vector.load %arg22[%c0_22, %c0_23, %c0_24] : memref<4x8x1xf32, #tpu.memory_space<vmem>>, vector<1x8x1xf32>
    %43 = vector.shape_cast %42 : vector<1x8x1xf32> to vector<8x1xf32>
    %44 = vector.shape_cast %19 : vector<8x1xf32> to vector<1x8x1xf32>
    tpu.vector_store %arg22[%c0_22, %c0_23, %c0_24], %44 {strides = array<i32>} : memref<4x8x1xf32, #tpu.memory_space<vmem>>, vector<1x8x1xf32>,
    %c0_25 = arith.constant 0 : index
    %c8 = arith.constant 8 : index
    %45 = vector.load %arg19[%c0_25, %c8] : memref<8x32xbf16, #tpu.memory_space<vmem>>, vector<8x8xbf16>
    %46 = vector.extract_strided_slice %9 {offsets = [0, 8], sizes = [8, 8], strides = [1, 1]} : vector<8x32xbf16> to vector<8x8xbf16>
    %cst_26 = arith.constant dense<0.000000e+00> : vector<8x8xf32>
    %47 = tpu.matmul %45, %46, %cst_26 {dimension_numbers = #tpu.dot_dimension_numbers<[1], [1], [0], [0], [0, 0, 1, 0], [], []>} : vector<8x8xbf16>, vector<8x8xbf16>, vector<8x8xf32> -> vector<8x8xf32>
    %c1 = arith.constant 1 : index
    %c0_27 = arith.constant 0 : index
    %c0_28 = arith.constant 0 : index
    %48 = vector.load %arg22[%c1, %c0_27, %c0_28] : memref<4x8x1xf32, #tpu.memory_space<vmem>>, vector<1x8x1xf32>
    %49 = vector.shape_cast %48 : vector<1x8x1xf32> to vector<8x1xf32>
    %cst_29 = arith.constant dense<0xFF800000> : vector<8xf32>
    %50 = vector.multi_reduction <maximumf>, %47, %cst_29 [1] : vector<8x8xf32> to vector<8xf32>
    %51 = vector.shape_cast %50 : vector<8xf32> to vector<8x1xf32>
    %52 = arith.maximumf %49, %51 : vector<8x1xf32>
    %53 = arith.subf %49, %52 : vector<8x1xf32>
    %54 = math.exp %53 : vector<8x1xf32>
    %55 = vector.broadcast %52 : vector<8x1xf32> to vector<8x8xf32>
    %56 = arith.subf %47, %55 : vector<8x8xf32>
    %57 = math.exp %56 : vector<8x8xf32>
    %c1_30 = arith.constant 1 : index
    %c0_31 = arith.constant 0 : index
    %c0_32 = arith.constant 0 : index
    %58 = vector.load %arg23[%c1_30, %c0_31, %c0_32] : memref<4x8x1xf32, #tpu.memory_space<vmem>>, vector<1x8x1xf32>
    %59 = vector.shape_cast %58 : vector<1x8x1xf32> to vector<8x1xf32>
    %60 = arith.mulf %54, %59 : vector<8x1xf32>
    %cst_33 = arith.constant dense<0.000000e+00> : vector<8xf32>
    %61 = vector.multi_reduction <add>, %57, %cst_33 [1] : vector<8x8xf32> to vector<8xf32>
    %62 = vector.shape_cast %61 : vector<8xf32> to vector<8x1xf32>
    %63 = arith.addf %60, %62 : vector<8x1xf32>
    %c1_34 = arith.constant 1 : index
    %c0_35 = arith.constant 0 : index
    %c0_36 = arith.constant 0 : index
    %64 = vector.load %arg23[%c1_34, %c0_35, %c0_36] : memref<4x8x1xf32, #tpu.memory_space<vmem>>, vector<1x8x1xf32>
    %65 = vector.shape_cast %64 : vector<1x8x1xf32> to vector<8x1xf32>
    %66 = vector.shape_cast %63 : vector<8x1xf32> to vector<1x8x1xf32>
    tpu.vector_store %arg23[%c1_34, %c0_35, %c0_36], %66 {strides = array<i32>} : memref<4x8x1xf32, #tpu.memory_space<vmem>>, vector<1x8x1xf32>,
    %67 = arith.truncf %57 : vector<8x8xf32> to vector<8x8xbf16>
    %68 = vector.extract_strided_slice %11 {offsets = [0, 8], sizes = [8, 8], strides = [1, 1]} : vector<8x32xbf16> to vector<8x8xbf16>
    %cst_37 = arith.constant dense<0.000000e+00> : vector<8x8xf32>
    %69 = tpu.matmul %67, %68, %cst_37 {dimension_numbers = #tpu.dot_dimension_numbers<[1], [0], [0], [1], [0, 0, 1, 1], [], []>} : vector<8x8xbf16>, vector<8x8xbf16>, vector<8x8xf32> -> vector<8x8xf32>
    %c0_38 = arith.constant 0 : index
    %c8_39 = arith.constant 8 : index
    %70 = vector.load %arg24[%c0_38, %c8_39] : memref<8x32xf32, #tpu.memory_space<vmem>>, vector<8x8xf32>
    %71 = vector.broadcast %54 : vector<8x1xf32> to vector<8x8xf32>
    %72 = arith.mulf %71, %70 : vector<8x8xf32>
    %73 = arith.addf %72, %69 : vector<8x8xf32>
    %c0_40 = arith.constant 0 : index
    %c8_41 = arith.constant 8 : index
    %74 = vector.load %arg24[%c0_40, %c8_41] : memref<8x32xf32, #tpu.memory_space<vmem>>, vector<8x8xf32>
    tpu.vector_store %arg24[%c0_40, %c8_41], %73 {strides = array<i32>} : memref<8x32xf32, #tpu.memory_space<vmem>>, vector<8x8xf32>,
    %c1_42 = arith.constant 1 : index
    %c0_43 = arith.constant 0 : index
    %c0_44 = arith.constant 0 : index
    %75 = vector.load %arg22[%c1_42, %c0_43, %c0_44] : memref<4x8x1xf32, #tpu.memory_space<vmem>>, vector<1x8x1xf32>
    %76 = vector.shape_cast %75 : vector<1x8x1xf32> to vector<8x1xf32>
    %77 = vector.shape_cast %52 : vector<8x1xf32> to vector<1x8x1xf32>
    tpu.vector_store %arg22[%c1_42, %c0_43, %c0_44], %77 {strides = array<i32>} : memref<4x8x1xf32, #tpu.memory_space<vmem>>, vector<1x8x1xf32>,
    %c0_45 = arith.constant 0 : index
    %c16 = arith.constant 16 : index
    %78 = vector.load %arg19[%c0_45, %c16] : memref<8x32xbf16, #tpu.memory_space<vmem>>, vector<8x8xbf16>
    %79 = vector.extract_strided_slice %9 {offsets = [0, 16], sizes = [8, 8], strides = [1, 1]} : vector<8x32xbf16> to vector<8x8xbf16>
    %cst_46 = arith.constant dense<0.000000e+00> : vector<8x8xf32>
    %80 = tpu.matmul %78, %79, %cst_46 {dimension_numbers = #tpu.dot_dimension_numbers<[1], [1], [0], [0], [0, 0, 1, 0], [], []>} : vector<8x8xbf16>, vector<8x8xbf16>, vector<8x8xf32> -> vector<8x8xf32>
    %c2 = arith.constant 2 : index
    %c0_47 = arith.constant 0 : index
    %c0_48 = arith.constant 0 : index
    %81 = vector.load %arg22[%c2, %c0_47, %c0_48] : memref<4x8x1xf32, #tpu.memory_space<vmem>>, vector<1x8x1xf32>
    %82 = vector.shape_cast %81 : vector<1x8x1xf32> to vector<8x1xf32>
    %cst_49 = arith.constant dense<0xFF800000> : vector<8xf32>
    %83 = vector.multi_reduction <maximumf>, %80, %cst_49 [1] : vector<8x8xf32> to vector<8xf32>
    %84 = vector.shape_cast %83 : vector<8xf32> to vector<8x1xf32>
    %85 = arith.maximumf %82, %84 : vector<8x1xf32>
    %86 = arith.subf %82, %85 : vector<8x1xf32>
    %87 = math.exp %86 : vector<8x1xf32>
    %88 = vector.broadcast %85 : vector<8x1xf32> to vector<8x8xf32>
    %89 = arith.subf %80, %88 : vector<8x8xf32>
    %90 = math.exp %89 : vector<8x8xf32>
    %c2_50 = arith.constant 2 : index
    %c0_51 = arith.constant 0 : index
    %c0_52 = arith.constant 0 : index
    %91 = vector.load %arg23[%c2_50, %c0_51, %c0_52] : memref<4x8x1xf32, #tpu.memory_space<vmem>>, vector<1x8x1xf32>
    %92 = vector.shape_cast %91 : vector<1x8x1xf32> to vector<8x1xf32>
    %93 = arith.mulf %87, %92 : vector<8x1xf32>
    %cst_53 = arith.constant dense<0.000000e+00> : vector<8xf32>
    %94 = vector.multi_reduction <add>, %90, %cst_53 [1] : vector<8x8xf32> to vector<8xf32>
    %95 = vector.shape_cast %94 : vector<8xf32> to vector<8x1xf32>
    %96 = arith.addf %93, %95 : vector<8x1xf32>
    %c2_54 = arith.constant 2 : index
    %c0_55 = arith.constant 0 : index
    %c0_56 = arith.constant 0 : index
    %97 = vector.load %arg23[%c2_54, %c0_55, %c0_56] : memref<4x8x1xf32, #tpu.memory_space<vmem>>, vector<1x8x1xf32>
    %98 = vector.shape_cast %97 : vector<1x8x1xf32> to vector<8x1xf32>
    %99 = vector.shape_cast %96 : vector<8x1xf32> to vector<1x8x1xf32>
    tpu.vector_store %arg23[%c2_54, %c0_55, %c0_56], %99 {strides = array<i32>} : memref<4x8x1xf32, #tpu.memory_space<vmem>>, vector<1x8x1xf32>,
    %100 = arith.truncf %90 : vector<8x8xf32> to vector<8x8xbf16>
    %101 = vector.extract_strided_slice %11 {offsets = [0, 16], sizes = [8, 8], strides = [1, 1]} : vector<8x32xbf16> to vector<8x8xbf16>
    %cst_57 = arith.constant dense<0.000000e+00> : vector<8x8xf32>
    %102 = tpu.matmul %100, %101, %cst_57 {dimension_numbers = #tpu.dot_dimension_numbers<[1], [0], [0], [1], [0, 0, 1, 1], [], []>} : vector<8x8xbf16>, vector<8x8xbf16>, vector<8x8xf32> -> vector<8x8xf32>
    %c0_58 = arith.constant 0 : index
    %c16_59 = arith.constant 16 : index
    %103 = vector.load %arg24[%c0_58, %c16_59] : memref<8x32xf32, #tpu.memory_space<vmem>>, vector<8x8xf32>
    %104 = vector.broadcast %87 : vector<8x1xf32> to vector<8x8xf32>
    %105 = arith.mulf %104, %103 : vector<8x8xf32>
    %106 = arith.addf %105, %102 : vector<8x8xf32>
    %c0_60 = arith.constant 0 : index
    %c16_61 = arith.constant 16 : index
    %107 = vector.load %arg24[%c0_60, %c16_61] : memref<8x32xf32, #tpu.memory_space<vmem>>, vector<8x8xf32>
    tpu.vector_store %arg24[%c0_60, %c16_61], %106 {strides = array<i32>} : memref<8x32xf32, #tpu.memory_space<vmem>>, vector<8x8xf32>,
    %c2_62 = arith.constant 2 : index
    %c0_63 = arith.constant 0 : index
    %c0_64 = arith.constant 0 : index
    %108 = vector.load %arg22[%c2_62, %c0_63, %c0_64] : memref<4x8x1xf32, #tpu.memory_space<vmem>>, vector<1x8x1xf32>
    %109 = vector.shape_cast %108 : vector<1x8x1xf32> to vector<8x1xf32>
    %110 = vector.shape_cast %85 : vector<8x1xf32> to vector<1x8x1xf32>
    tpu.vector_store %arg22[%c2_62, %c0_63, %c0_64], %110 {strides = array<i32>} : memref<4x8x1xf32, #tpu.memory_space<vmem>>, vector<1x8x1xf32>,
    %c0_65 = arith.constant 0 : index
    %c24 = arith.constant 24 : index
    %111 = vector.load %arg19[%c0_65, %c24] : memref<8x32xbf16, #tpu.memory_space<vmem>>, vector<8x8xbf16>
    %112 = vector.extract_strided_slice %9 {offsets = [0, 24], sizes = [8, 8], strides = [1, 1]} : vector<8x32xbf16> to vector<8x8xbf16>
    %cst_66 = arith.constant dense<0.000000e+00> : vector<8x8xf32>
    %113 = tpu.matmul %111, %112, %cst_66 {dimension_numbers = #tpu.dot_dimension_numbers<[1], [1], [0], [0], [0, 0, 1, 0], [], []>} : vector<8x8xbf16>, vector<8x8xbf16>, vector<8x8xf32> -> vector<8x8xf32>
    %c3 = arith.constant 3 : index
    %c0_67 = arith.constant 0 : index
    %c0_68 = arith.constant 0 : index
    %114 = vector.load %arg22[%c3, %c0_67, %c0_68] : memref<4x8x1xf32, #tpu.memory_space<vmem>>, vector<1x8x1xf32>
    %115 = vector.shape_cast %114 : vector<1x8x1xf32> to vector<8x1xf32>
    %cst_69 = arith.constant dense<0xFF800000> : vector<8xf32>
    %116 = vector.multi_reduction <maximumf>, %113, %cst_69 [1] : vector<8x8xf32> to vector<8xf32>
    %117 = vector.shape_cast %116 : vector<8xf32> to vector<8x1xf32>
    %118 = arith.maximumf %115, %117 : vector<8x1xf32>
    %119 = arith.subf %115, %118 : vector<8x1xf32>
    %120 = math.exp %119 : vector<8x1xf32>
    %121 = vector.broadcast %118 : vector<8x1xf32> to vector<8x8xf32>
    %122 = arith.subf %113, %121 : vector<8x8xf32>
    %123 = math.exp %122 : vector<8x8xf32>
    %c3_70 = arith.constant 3 : index
    %c0_71 = arith.constant 0 : index
    %c0_72 = arith.constant 0 : index
    %124 = vector.load %arg23[%c3_70, %c0_71, %c0_72] : memref<4x8x1xf32, #tpu.memory_space<vmem>>, vector<1x8x1xf32>
    %125 = vector.shape_cast %124 : vector<1x8x1xf32> to vector<8x1xf32>
    %126 = arith.mulf %120, %125 : vector<8x1xf32>
    %cst_73 = arith.constant dense<0.000000e+00> : vector<8xf32>
    %127 = vector.multi_reduction <add>, %123, %cst_73 [1] : vector<8x8xf32> to vector<8xf32>
    %128 = vector.shape_cast %127 : vector<8xf32> to vector<8x1xf32>
    %129 = arith.addf %126, %128 : vector<8x1xf32>
    %c3_74 = arith.constant 3 : index
    %c0_75 = arith.constant 0 : index
    %c0_76 = arith.constant 0 : index
    %130 = vector.load %arg23[%c3_74, %c0_75, %c0_76] : memref<4x8x1xf32, #tpu.memory_space<vmem>>, vector<1x8x1xf32>
    %131 = vector.shape_cast %130 : vector<1x8x1xf32> to vector<8x1xf32>
    %132 = vector.shape_cast %129 : vector<8x1xf32> to vector<1x8x1xf32>
    tpu.vector_store %arg23[%c3_74, %c0_75, %c0_76], %132 {strides = array<i32>} : memref<4x8x1xf32, #tpu.memory_space<vmem>>, vector<1x8x1xf32>,
    %133 = arith.truncf %123 : vector<8x8xf32> to vector<8x8xbf16>
    %134 = vector.extract_strided_slice %11 {offsets = [0, 24], sizes = [8, 8], strides = [1, 1]} : vector<8x32xbf16> to vector<8x8xbf16>
    %cst_77 = arith.constant dense<0.000000e+00> : vector<8x8xf32>
    %135 = tpu.matmul %133, %134, %cst_77 {dimension_numbers = #tpu.dot_dimension_numbers<[1], [0], [0], [1], [0, 0, 1, 1], [], []>} : vector<8x8xbf16>, vector<8x8xbf16>, vector<8x8xf32> -> vector<8x8xf32>
    %c0_78 = arith.constant 0 : index
    %c24_79 = arith.constant 24 : index
    %136 = vector.load %arg24[%c0_78, %c24_79] : memref<8x32xf32, #tpu.memory_space<vmem>>, vector<8x8xf32>
    %137 = vector.broadcast %120 : vector<8x1xf32> to vector<8x8xf32>
    %138 = arith.mulf %137, %136 : vector<8x8xf32>
    %139 = arith.addf %138, %135 : vector<8x8xf32>
    %c0_80 = arith.constant 0 : index
    %c24_81 = arith.constant 24 : index
    %140 = vector.load %arg24[%c0_80, %c24_81] : memref<8x32xf32, #tpu.memory_space<vmem>>, vector<8x8xf32>
    tpu.vector_store %arg24[%c0_80, %c24_81], %139 {strides = array<i32>} : memref<8x32xf32, #tpu.memory_space<vmem>>, vector<8x8xf32>,
    %c3_82 = arith.constant 3 : index
    %c0_83 = arith.constant 0 : index
    %c0_84 = arith.constant 0 : index
    %141 = vector.load %arg22[%c3_82, %c0_83, %c0_84] : memref<4x8x1xf32, #tpu.memory_space<vmem>>, vector<1x8x1xf32>
    %142 = vector.shape_cast %141 : vector<1x8x1xf32> to vector<8x1xf32>
    %143 = vector.shape_cast %118 : vector<8x1xf32> to vector<1x8x1xf32>
    tpu.vector_store %arg22[%c3_82, %c0_83, %c0_84], %143 {strides = array<i32>} : memref<4x8x1xf32, #tpu.memory_space<vmem>>, vector<1x8x1xf32>,
    %c1_i32 = arith.constant 1 : i32
    %144 = arith.cmpi eq, %arg2, %c1_i32 : i32
    %145 = arith.extui %144 : i1 to i32
    %c0_i32_85 = arith.constant 0 : i32
    %146 = arith.cmpi ne, %145, %c0_i32_85 : i32
    scf.if %146 {
      %c0_86 = arith.constant 0 : index
      %c0_87 = arith.constant 0 : index
      %c0_88 = arith.constant 0 : index
      %147 = vector.load %arg23[%c0_86, %c0_87, %c0_88] : memref<4x8x1xf32, #tpu.memory_space<vmem>>, vector<1x8x1xf32>
      %148 = vector.shape_cast %147 : vector<1x8x1xf32> to vector<8x1xf32>
      %149 = tpu.reciprocal %148 {approx = true} : vector<8x1xf32> -> vector<8x1xf32>
      %c0_89 = arith.constant 0 : index
      %c0_90 = arith.constant 0 : index
      %150 = vector.load %arg24[%c0_89, %c0_90] : memref<8x32xf32, #tpu.memory_space<vmem>>, vector<8x8xf32>
      %151 = vector.broadcast %149 : vector<8x1xf32> to vector<8x8xf32>
      %152 = arith.mulf %150, %151 : vector<8x8xf32>
      %c0_91 = arith.constant 0 : index
      %c0_92 = arith.constant 0 : index
      %153 = vector.load %arg24[%c0_91, %c0_92] : memref<8x32xf32, #tpu.memory_space<vmem>>, vector<8x8xf32>
      tpu.vector_store %arg24[%c0_91, %c0_92], %152 {strides = array<i32>} : memref<8x32xf32, #tpu.memory_space<vmem>>, vector<8x8xf32>,
      %c1_93 = arith.constant 1 : index
      %c0_94 = arith.constant 0 : index
      %c0_95 = arith.constant 0 : index
      %154 = vector.load %arg23[%c1_93, %c0_94, %c0_95] : memref<4x8x1xf32, #tpu.memory_space<vmem>>, vector<1x8x1xf32>
      %155 = vector.shape_cast %154 : vector<1x8x1xf32> to vector<8x1xf32>
      %156 = tpu.reciprocal %155 {approx = true} : vector<8x1xf32> -> vector<8x1xf32>
      %c0_96 = arith.constant 0 : index
      %c8_97 = arith.constant 8 : index
      %157 = vector.load %arg24[%c0_96, %c8_97] : memref<8x32xf32, #tpu.memory_space<vmem>>, vector<8x8xf32>
      %158 = vector.broadcast %156 : vector<8x1xf32> to vector<8x8xf32>
      %159 = arith.mulf %157, %158 : vector<8x8xf32>
      %c0_98 = arith.constant 0 : index
      %c8_99 = arith.constant 8 : index
      %160 = vector.load %arg24[%c0_98, %c8_99] : memref<8x32xf32, #tpu.memory_space<vmem>>, vector<8x8xf32>
      tpu.vector_store %arg24[%c0_98, %c8_99], %159 {strides = array<i32>} : memref<8x32xf32, #tpu.memory_space<vmem>>, vector<8x8xf32>,
      %c2_100 = arith.constant 2 : index
      %c0_101 = arith.constant 0 : index
      %c0_102 = arith.constant 0 : index
      %161 = vector.load %arg23[%c2_100, %c0_101, %c0_102] : memref<4x8x1xf32, #tpu.memory_space<vmem>>, vector<1x8x1xf32>
      %162 = vector.shape_cast %161 : vector<1x8x1xf32> to vector<8x1xf32>
      %163 = tpu.reciprocal %162 {approx = true} : vector<8x1xf32> -> vector<8x1xf32>
      %c0_103 = arith.constant 0 : index
      %c16_104 = arith.constant 16 : index
      %164 = vector.load %arg24[%c0_103, %c16_104] : memref<8x32xf32, #tpu.memory_space<vmem>>, vector<8x8xf32>
      %165 = vector.broadcast %163 : vector<8x1xf32> to vector<8x8xf32>
      %166 = arith.mulf %164, %165 : vector<8x8xf32>
      %c0_105 = arith.constant 0 : index
      %c16_106 = arith.constant 16 : index
      %167 = vector.load %arg24[%c0_105, %c16_106] : memref<8x32xf32, #tpu.memory_space<vmem>>, vector<8x8xf32>
      tpu.vector_store %arg24[%c0_105, %c16_106], %166 {strides = array<i32>} : memref<8x32xf32, #tpu.memory_space<vmem>>, vector<8x8xf32>,
      %c3_107 = arith.constant 3 : index
      %c0_108 = arith.constant 0 : index
      %c0_109 = arith.constant 0 : index
      %168 = vector.load %arg23[%c3_107, %c0_108, %c0_109] : memref<4x8x1xf32, #tpu.memory_space<vmem>>, vector<1x8x1xf32>
      %169 = vector.shape_cast %168 : vector<1x8x1xf32> to vector<8x1xf32>
      %170 = tpu.reciprocal %169 {approx = true} : vector<8x1xf32> -> vector<8x1xf32>
      %c0_110 = arith.constant 0 : index
      %c24_111 = arith.constant 24 : index
      %171 = vector.load %arg24[%c0_110, %c24_111] : memref<8x32xf32, #tpu.memory_space<vmem>>, vector<8x8xf32>
      %172 = vector.broadcast %170 : vector<8x1xf32> to vector<8x8xf32>
      %173 = arith.mulf %171, %172 : vector<8x8xf32>
      %c0_112 = arith.constant 0 : index
      %c24_113 = arith.constant 24 : index
      %174 = vector.load %arg24[%c0_112, %c24_113] : memref<8x32xf32, #tpu.memory_space<vmem>>, vector<8x8xf32>
      tpu.vector_store %arg24[%c0_112, %c24_113], %173 {strides = array<i32>} : memref<8x32xf32, #tpu.memory_space<vmem>>, vector<8x8xf32>,
      %c0_114 = arith.constant 0 : index
      %c0_115 = arith.constant 0 : index
      %175 = vector.load %arg24[%c0_114, %c0_115] : memref<8x32xf32, #tpu.memory_space<vmem>>, vector<8x32xf32>
      %176 = arith.truncf %175 : vector<8x32xf32> to vector<8x32xbf16>
      %c0_116 = arith.constant 0 : index
      %c0_117 = arith.constant 0 : index
      %177 = vector.load %arg8[%c0_116, %c0_117] : memref<32x32xbf16, #tpu.memory_space<vmem>>, vector<32x32xbf16>
      %cst_118 = arith.constant dense<0.000000e+00> : vector<8x32xf32>
      %178 = tpu.matmul %176, %177, %cst_118 {dimension_numbers = #tpu.dot_dimension_numbers<[1], [0], [0], [1], [0, 0, 1, 1], [], []>} : vector<8x32xbf16>, vector<32x32xbf16>, vector<8x32xf32> -> vector<8x32xf32>
      %c0_119 = arith.constant 0 : index
      %c0_120 = arith.constant 0 : index
      %179 = vector.load %arg9[%c0_119, %c0_120] : memref<1x32xf32, #tpu.memory_space<vmem>>, vector<1x32xf32>
      %180 = vector.broadcast %179 : vector<1x32xf32> to vector<8x32xf32>
      %181 = arith.addf %178, %180 : vector<8x32xf32>
      %c0_121 = arith.constant 0 : index
      %c0_122 = arith.constant 0 : index
      %c0_123 = arith.constant 0 : index
      %182 = vector.load %arg3[%c0_121, %c0_122, %c0_123] : memref<1x8x32xf32, #tpu.memory_space<vmem>>, vector<1x8x32xf32>
      %183 = vector.shape_cast %182 : vector<1x8x32xf32> to vector<8x32xf32>
      %184 = arith.addf %183, %181 : vector<8x32xf32>
      %c0_124 = arith.constant 0 : index
      %c0_125 = arith.constant 0 : index
      %185 = vector.load %arg16[%c0_124, %c0_125] : memref<1x32xf32, #tpu.memory_space<vmem>>, vector<1x32xf32>
      %c0_126 = arith.constant 0 : index
      %c0_127 = arith.constant 0 : index
      %186 = vector.load %arg17[%c0_126, %c0_127] : memref<1x32xf32, #tpu.memory_space<vmem>>, vector<1x32xf32>
      %cst_128 = arith.constant dense<0.000000e+00> : vector<8xf32>
      %187 = vector.multi_reduction <add>, %184, %cst_128 [1] : vector<8x32xf32> to vector<8xf32>
      %188 = vector.shape_cast %187 : vector<8xf32> to vector<8x1xf32>
      %cst_129 = arith.constant 3.200000e+01 : f32
      %189 = vector.broadcast %cst_129 : f32 to vector<8x1xf32>
      %190 = arith.divf %188, %189 : vector<8x1xf32>
      %191 = vector.broadcast %190 : vector<8x1xf32> to vector<8x32xf32>
      %192 = arith.subf %184, %191 : vector<8x32xf32>
      %193 = arith.mulf %192, %192 : vector<8x32xf32>
      %cst_130 = arith.constant dense<0.000000e+00> : vector<8xf32>
      %194 = vector.multi_reduction <add>, %193, %cst_130 [1] : vector<8x32xf32> to vector<8xf32>
      %195 = vector.shape_cast %194 : vector<8xf32> to vector<8x1xf32>
      %cst_131 = arith.constant 3.200000e+01 : f32
      %196 = vector.broadcast %cst_131 : f32 to vector<8x1xf32>
      %197 = arith.divf %195, %196 : vector<8x1xf32>
      %198 = vector.broadcast %190 : vector<8x1xf32> to vector<8x32xf32>
      %199 = arith.subf %184, %198 : vector<8x32xf32>
      %cst_132 = arith.constant 9.99999974E-6 : f32
      %200 = vector.broadcast %cst_132 : f32 to vector<8x1xf32>
      %201 = arith.addf %197, %200 : vector<8x1xf32>
      %202 = math.rsqrt %201 : vector<8x1xf32>
      %203 = vector.broadcast %202 : vector<8x1xf32> to vector<8x32xf32>
      %204 = arith.mulf %199, %203 : vector<8x32xf32>
      %205 = vector.broadcast %185 : vector<1x32xf32> to vector<8x32xf32>
      %206 = arith.mulf %204, %205 : vector<8x32xf32>
      %207 = vector.broadcast %186 : vector<1x32xf32> to vector<8x32xf32>
      %208 = arith.addf %206, %207 : vector<8x32xf32>
      %209 = arith.truncf %208 : vector<8x32xf32> to vector<8x32xbf16>
      %c0_133 = arith.constant 0 : index
      %c0_134 = arith.constant 0 : index
      %210 = vector.load %arg10[%c0_133, %c0_134] : memref<32x256xbf16, #tpu.memory_space<vmem>>, vector<32x256xbf16>
      %cst_135 = arith.constant dense<0.000000e+00> : vector<8x256xf32>
      %211 = tpu.matmul %209, %210, %cst_135 {dimension_numbers = #tpu.dot_dimension_numbers<[1], [0], [0], [1], [0, 0, 1, 1], [], []>} : vector<8x32xbf16>, vector<32x256xbf16>, vector<8x256xf32> -> vector<8x256xf32>
      %c0_136 = arith.constant 0 : index
      %c0_137 = arith.constant 0 : index
      %212 = vector.load %arg11[%c0_136, %c0_137] : memref<1x256xf32, #tpu.memory_space<vmem>>, vector<1x256xf32>
      %213 = vector.broadcast %212 : vector<1x256xf32> to vector<8x256xf32>
      %214 = arith.addf %211, %213 : vector<8x256xf32>
      %cst_138 = arith.constant 0.000000e+00 : f32
      %215 = vector.broadcast %cst_138 : f32 to vector<8x256xf32>
      %216 = arith.maximumf %214, %215 : vector<8x256xf32>
      %217 = arith.truncf %216 : vector<8x256xf32> to vector<8x256xbf16>
      %c0_139 = arith.constant 0 : index
      %c0_140 = arith.constant 0 : index
      %218 = vector.load %arg12[%c0_139, %c0_140] : memref<256x32xbf16, #tpu.memory_space<vmem>>, vector<256x32xbf16>
      %cst_141 = arith.constant dense<0.000000e+00> : vector<8x32xf32>
      %219 = tpu.matmul %217, %218, %cst_141 {dimension_numbers = #tpu.dot_dimension_numbers<[1], [0], [0], [1], [0, 0, 1, 1], [], []>} : vector<8x256xbf16>, vector<256x32xbf16>, vector<8x32xf32> -> vector<8x32xf32>
      %c0_142 = arith.constant 0 : index
      %c0_143 = arith.constant 0 : index
      %220 = vector.load %arg13[%c0_142, %c0_143] : memref<1x32xf32, #tpu.memory_space<vmem>>, vector<1x32xf32>
      %221 = vector.broadcast %220 : vector<1x32xf32> to vector<8x32xf32>
      %222 = arith.addf %219, %221 : vector<8x32xf32>
      %223 = arith.addf %184, %222 : vector<8x32xf32>
      %c0_144 = arith.constant 0 : index
      %c0_145 = arith.constant 0 : index
      %c0_146 = arith.constant 0 : index
      %224 = vector.load %arg18[%c0_144, %c0_145, %c0_146] : memref<1x8x32xf32, #tpu.memory_space<vmem>>, vector<1x8x32xf32>
      %225 = vector.shape_cast %224 : vector<1x8x32xf32> to vector<8x32xf32>
      %226 = vector.shape_cast %223 : vector<8x32xf32> to vector<1x8x32xf32>
      tpu.vector_store %arg18[%c0_144, %c0_145, %c0_146], %226 {strides = array<i32>} : memref<1x8x32xf32, #tpu.memory_space<vmem>>, vector<1x8x32xf32>,
    } else {
    }
    return
  }
  func.func @transform_0(%arg0: i32, %arg1: i32, %arg2: i32) -> (i32, i32, i32) {
    %c0_i32 = arith.constant 0 : i32
    %c0_i32_0 = arith.constant 0 : i32
    return %arg0, %arg1, %c0_i32 : i32, i32, i32
  }
  func.func @transform_1(%arg0: i32, %arg1: i32, %arg2: i32) -> (i32, i32, i32) {
    %c0_i32 = arith.constant 0 : i32
    %0 = arith.cmpi eq, %arg1, %c0_i32 : i32
    %c0_i32_0 = arith.constant 0 : i32
    %1 = arith.select %0, %arg2, %c0_i32_0 : i32
    %c0_i32_1 = arith.constant 0 : i32
    %c0_i32_2 = arith.constant 0 : i32
    return %arg0, %1, %c0_i32_1 : i32, i32, i32
  }
  func.func @transform_2(%arg0: i32, %arg1: i32, %arg2: i32) -> (i32, i32) {
    %c0_i32 = arith.constant 0 : i32
    %c0_i32_0 = arith.constant 0 : i32
    %c0_i32_1 = arith.constant 0 : i32
    return %c0_i32, %c0_i32_0 : i32, i32
  }
  func.func @transform_3(%arg0: i32, %arg1: i32, %arg2: i32) -> (i32, i32) {
    %c0_i32 = arith.constant 0 : i32
    %c0_i32_0 = arith.constant 0 : i32
    %c0_i32_1 = arith.constant 0 : i32
    return %c0_i32, %c0_i32_0 : i32, i32
  }
  func.func @transform_4(%arg0: i32, %arg1: i32, %arg2: i32) -> (i32, i32) {
    %c0_i32 = arith.constant 0 : i32
    %c0_i32_0 = arith.constant 0 : i32
    %c0_i32_1 = arith.constant 0 : i32
    return %c0_i32, %c0_i32_0 : i32, i32
  }
  func.func @transform_5(%arg0: i32, %arg1: i32, %arg2: i32) -> (i32, i32) {
    %c0_i32 = arith.constant 0 : i32
    %c0_i32_0 = arith.constant 0 : i32
    %c0_i32_1 = arith.constant 0 : i32
    return %c0_i32, %c0_i32_0 : i32, i32
  }
  func.func @transform_6(%arg0: i32, %arg1: i32, %arg2: i32) -> (i32, i32) {
    %c0_i32 = arith.constant 0 : i32
    %c0_i32_0 = arith.constant 0 : i32
    %c0_i32_1 = arith.constant 0 : i32
    return %c0_i32, %c0_i32_0 : i32, i32
  }
  func.func @transform_7(%arg0: i32, %arg1: i32, %arg2: i32) -> (i32, i32) {
    %c0_i32 = arith.constant 0 : i32
    %c0_i32_0 = arith.constant 0 : i32
    %c0_i32_1 = arith.constant 0 : i32
    return %c0_i32, %c0_i32_0 : i32, i32
  }
  func.func @transform_8(%arg0: i32, %arg1: i32, %arg2: i32) -> (i32, i32) {
    %c0_i32 = arith.constant 0 : i32
    %c0_i32_0 = arith.constant 0 : i32
    %c0_i32_1 = arith.constant 0 : i32
    return %c0_i32, %c0_i32_0 : i32, i32
  }
  func.func @transform_9(%arg0: i32, %arg1: i32, %arg2: i32) -> (i32, i32) {
    %c0_i32 = arith.constant 0 : i32
    %c0_i32_0 = arith.constant 0 : i32
    %c0_i32_1 = arith.constant 0 : i32
    return %c0_i32, %c0_i32_0 : i32, i32
  }
  func.func @transform_10(%arg0: i32, %arg1: i32, %arg2: i32) -> (i32, i32) {
    %c0_i32 = arith.constant 0 : i32
    %c0_i32_0 = arith.constant 0 : i32
    %c0_i32_1 = arith.constant 0 : i32
    return %c0_i32, %c0_i32_0 : i32, i32
  }
  func.func @transform_11(%arg0: i32, %arg1: i32, %arg2: i32) -> (i32, i32) {
    %c0_i32 = arith.constant 0 : i32
    %c0_i32_0 = arith.constant 0 : i32
    %c0_i32_1 = arith.constant 0 : i32
    return %c0_i32, %c0_i32_0 : i32, i32
  }
  func.func @transform_12(%arg0: i32, %arg1: i32, %arg2: i32) -> (i32, i32) {
    %c0_i32 = arith.constant 0 : i32
    %c0_i32_0 = arith.constant 0 : i32
    %c0_i32_1 = arith.constant 0 : i32
    return %c0_i32, %c0_i32_0 : i32, i32
  }
  func.func @transform_13(%arg0: i32, %arg1: i32, %arg2: i32) -> (i32, i32) {
    %c0_i32 = arith.constant 0 : i32
    %c0_i32_0 = arith.constant 0 : i32
    %c0_i32_1 = arith.constant 0 : i32
    return %c0_i32, %c0_i32_0 : i32, i32
  }
  func.func @transform_14(%arg0: i32, %arg1: i32, %arg2: i32) -> (i32, i32) {
    %c0_i32 = arith.constant 0 : i32
    %c0_i32_0 = arith.constant 0 : i32
    %c0_i32_1 = arith.constant 0 : i32
    return %c0_i32, %c0_i32_0 : i32, i32
  }
  func.func @transform_15(%arg0: i32, %arg1: i32, %arg2: i32) -> (i32, i32, i32) {
    %c0_i32 = arith.constant 0 : i32
    %c0_i32_0 = arith.constant 0 : i32
    return %arg0, %arg1, %c0_i32 : i32, i32, i32
  }
}

</mosaic_0001>

<llo_original>
// kernel: tpu_custom_call.1
$region0: #{tpu_custom_call.1}
  #allocation0 [shape = 'u32[]', space=smem, size = 0x4, offset = 0x4, fixed_abs, tag = 'smem constant byte address 0x4 - core index']
  #allocation1 [shape = 'u32[144,128]{1,0:T(1,128)}', space=vmem, size = 0x12000, scoped, tag = 'internal scratch']
  #allocation2 [shape = 'bf16[8,32]{1,0:T(8,128)(2,1)}', space=vmem, size = 0x800, scoped, tag = 'scratch operand']
  #allocation3 [shape = 'bf16[16,32]{1,0:T(8,128)(2,1)}', space=vmem, size = 0x1000, scoped, tag = 'scratch operand']
  #allocation4 [shape = 'bf16[16,32]{1,0:T(8,128)(2,1)}', space=vmem, size = 0x1000, scoped, tag = 'scratch operand']
  #allocation5 [shape = 'f32[4,8,1]{2,1,0:T(8,128)}', space=vmem, size = 0x4000, scoped, tag = 'scratch operand']
  #allocation6 [shape = 'f32[4,8,1]{2,1,0:T(8,128)}', space=vmem, size = 0x4000, scoped, tag = 'scratch operand']
  #allocation7 [shape = 'f32[8,32]{1,0:T(8,128)}', space=vmem, size = 0x1000, scoped, tag = 'scratch operand']
  %s0 = inlined_call_operand.vmem [shape: f32[2,16,32], index: 0, kind: input, shape index: {}]
  %s1 = inlined_call_operand.vmem [shape: f32[2,16,32], index: 1, kind: input, shape index: {}]
  %s2 = inlined_call_operand.vmem [shape: bf16[32,32], index: 2, kind: input, shape index: {}]
  %s3 = inlined_call_operand.vmem [shape: bf16[32,32], index: 3, kind: input, shape index: {}]
  %s4 = inlined_call_operand.vmem [shape: bf16[32,32], index: 4, kind: input, shape index: {}]
  %s5 = inlined_call_operand.vmem [shape: bf16[32,32], index: 5, kind: input, shape index: {}]
  %s6 = inlined_call_operand.vmem [shape: f32[1,32], index: 6, kind: input, shape index: {}]
  %s7 = inlined_call_operand.vmem [shape: bf16[32,256], index: 7, kind: input, shape index: {}]
  %s8 = inlined_call_operand.vmem [shape: f32[1,256], index: 8, kind: input, shape index: {}]
  %s9 = inlined_call_operand.vmem [shape: bf16[256,32], index: 9, kind: input, shape index: {}]
  %s10 = inlined_call_operand.vmem [shape: f32[1,32], index: 10, kind: input, shape index: {}]
  %s11 = inlined_call_operand.vmem [shape: f32[1,32], index: 11, kind: input, shape index: {}]
  %s12 = inlined_call_operand.vmem [shape: f32[1,32], index: 12, kind: input, shape index: {}]
  %s13 = inlined_call_operand.vmem [shape: f32[1,32], index: 13, kind: input, shape index: {}]
  %s14 = inlined_call_operand.vmem [shape: f32[1,32], index: 14, kind: input, shape index: {}]
  %s15 = inlined_call_operand.hbm [shape: f32[2,16,32], index: 15, kind: output, shape index: {}]
  %s16 = sld [smem:[#allocation0]]
  $region105: #{tpu_custom_call.1} parent=0
    _
  %s18 = ssub.s32 1, %s16
  %s19 = scalar_select 0, %s18, %s16
  $region1: #{tpu_custom_call.1} parent=0
    #allocation8 [shape = 'u8[8192]{0}', space=vmem, size = 0x2000, scoped, tag = 'output window, operand 0']
    #allocation9 [shape = 's32[2]{0}', space=sflag, size = 0x8, scoped, tag = 'scoped memory for tpu_custom_call.1']
    %20 = vsyncpa [#allocation9], 0
    %s21 = scalar_lea.sflag [#allocation9], 1
    %22 = vsyncpa %s21, 0
    loop: start=0, step=1, limit=10
    $region2: #{tpu_custom_call.1} parent=1 // loop_pre_header
      _
    $region3: #{tpu_custom_call.1} parent=1 // loop_header
      %s24 = sphi 0, %s28
      %p25 = scmp.ge.s32.totalorder %s24, 10
      %s31 = sphi 0, %s50
      %s32 = sphi 0, %s46
      %s33 = sphi 0, %s42
      %s34 = sphi 0, %s31
      %s35 = sphi 0, %s32
      %s36 = sphi 0, %s33
      %s37 = sphi 0, %s34
      %s38 = sphi 0, %s35
      %s39 = sphi 0, %s36
      %s55 = sphi 0, %s57
      %s58 = sphi 0, %s55
      %s59 = sphi 0, %s58
      %s75 = sphi 0, %s59
      %s87 = sphi 0, %s89
      %s90 = sphi 0, %s87
      %s91 = sphi 0, %s90
      %s107 = sphi 0, %s91
      %s111 = sphi 0, %s111
      %s113 = sphi 0, %s111
      %s114 = sphi 0, %s113
      %s128 = sphi 0, %s114
      %s132 = sphi 0, %s132
      %s134 = sphi 0, %s132
      %s135 = sphi 0, %s134
      %s149 = sphi 0, %s135
      %s153 = sphi 0, %s153
      %s155 = sphi 0, %s153
      %s156 = sphi 0, %s155
      %s170 = sphi 0, %s156
      %s174 = sphi 0, %s174
      %s176 = sphi 0, %s174
      %s177 = sphi 0, %s176
      %s191 = sphi 0, %s177
      %s195 = sphi 0, %s195
      %s197 = sphi 0, %s195
      %s198 = sphi 0, %s197
      %s212 = sphi 0, %s198
      %s216 = sphi 0, %s216
      %s218 = sphi 0, %s216
      %s219 = sphi 0, %s218
      %s233 = sphi 0, %s219
      %s237 = sphi 0, %s237
      %s239 = sphi 0, %s237
      %s240 = sphi 0, %s239
      %s254 = sphi 0, %s240
      %s258 = sphi 0, %s258
      %s260 = sphi 0, %s258
      %s261 = sphi 0, %s260
      %s275 = sphi 0, %s261
      %s279 = sphi 0, %s279
      %s281 = sphi 0, %s279
      %s282 = sphi 0, %s281
      %s296 = sphi 0, %s282
      %s300 = sphi 0, %s300
      %s302 = sphi 0, %s300
      %s303 = sphi 0, %s302
      %s317 = sphi 0, %s303
      %s321 = sphi 0, %s321
      %s323 = sphi 0, %s321
      %s324 = sphi 0, %s323
      %s338 = sphi 0, %s324
      %s342 = sphi 0, %s342
      %s344 = sphi 0, %s342
      %s345 = sphi 0, %s344
      %s359 = sphi 0, %s345
      %s363 = sphi 0, %s363
      %s365 = sphi 0, %s363
      %s366 = sphi 0, %s365
      %s380 = sphi 0, %s366
      %s388 = sphi 0, %s390
      %s391 = sphi 0, %s388
      %s392 = sphi 0, %s391
      %s408 = sphi 0, %s392
    $region4: #{tpu_custom_call.1} parent=1 // loop_header_branch
      %27 = sbr.rel (%p25) target = $region8
    $region5: #{tpu_custom_call.1} parent=1 // loop_body
      %s29 = ssub.s32 %s24, 1
      %s30 = ssub.s32 %s24, 2
      %s40 = sadd.s32 1, %s33
      %p41 = scmp.ge.s32.totalorder %s40, 2
      %s42 = scalar_select %p41, 0, %s40
      %s43 = sadd.s32 1, %s32
      %s44 = scalar_select %p41, %s43, %s32
      %p45 = scmp.ge.s32.totalorder %s44, 2
      %s46 = scalar_select %p45, 0, %s44
      %s47 = sadd.s32 1, %s31
      %s48 = scalar_select %p45, %s47, %s31
      %p49 = scmp.ge.s32.totalorder %s48, 2
      %s50 = scalar_select %p49, 0, %s48
      %s51 = ssub.s32 %s31, %s50
      %s52 = ssub.s32 %s32, %s46
      %s53 = sor.u32 %s51, %s52
      %p54 = scmp.eq.s32.totalorder %s53, 0
      %s56 = sadd.s32 %s55, 1
      %s57 = scalar_select %p54, %s55, %s56
      %p60 = pneg %p54
      %p61 = scmp.eq.s32.totalorder %s24, 7
      %p62 = por %p60, %p61
      %p63 = scmp.ne.s32.totalorder %s55, %s58
      %p64 = scmp.eq.s32.totalorder %s24, 0
      %p65 = por %p63, %p64
      %p66 = scmp.ne.s32.totalorder %s55, %s58
      %p67 = scmp.eq.s32.totalorder %s29, 7
      %p68 = por %p66, %p67
      %p69 = scmp.ne.s32.totalorder %s58, %s59
      %p70 = scmp.eq.s32.totalorder %s29, 0
      %p71 = por %p69, %p70
      %p72 = scmp.ne.s32.totalorder %s58, %s59
      %p73 = scmp.eq.s32.totalorder %s30, 7
      %p74 = por %p72, %p73
      %p76 = scmp.ne.s32.totalorder %s59, %s75
      %p77 = scmp.eq.s32.totalorder %s30, 0
      %p78 = por %p76, %p77
      %p79 = scmp.eq.s32.totalorder %s32, 0
      %s80 = scalar_select %p79, %s33, 0
      %p81 = scmp.eq.s32.totalorder %s46, 0
      %s82 = scalar_select %p81, %s42, 0
      %s83 = ssub.s32 %s31, %s50
      %s84 = ssub.s32 %s80, %s82
      %s85 = sor.u32 %s83, %s84
      %p86 = scmp.eq.s32.totalorder %s85, 0
      %s88 = sadd.s32 %s87, 1
      %s89 = scalar_select %p86, %s87, %s88
      %p92 = pneg %p86
      %p93 = scmp.eq.s32.totalorder %s24, 7
      %p94 = por %p92, %p93
      %p95 = scmp.ne.s32.totalorder %s87, %s90
      %p96 = scmp.eq.s32.totalorder %s24, 0
      %p97 = por %p95, %p96
      %p98 = scmp.ne.s32.totalorder %s87, %s90
      %p99 = scmp.eq.s32.totalorder %s29, 7
      %p100 = por %p98, %p99
      %p101 = scmp.ne.s32.totalorder %s90, %s91
      %p102 = scmp.eq.s32.totalorder %s29, 0
      %p103 = por %p101, %p102
      %p104 = scmp.ne.s32.totalorder %s90, %s91
      %p105 = scmp.eq.s32.totalorder %s30, 7
      %p106 = por %p104, %p105
      %p108 = scmp.ne.s32.totalorder %s91, %s107
      %p109 = scmp.eq.s32.totalorder %s30, 0
      %p110 = por %p108, %p109
      %s112 = sadd.s32 %s111, 1
      %p115 = scmp.eq.s32.totalorder %s24, 7
      %p116 = scmp.ne.s32.totalorder %s111, %s113
      %p117 = scmp.eq.s32.totalorder %s24, 0
      %p118 = por %p116, %p117
      %p119 = scmp.ne.s32.totalorder %s111, %s113
      %p120 = scmp.eq.s32.totalorder %s29, 7
      %p121 = por %p119, %p120
      %p122 = scmp.ne.s32.totalorder %s113, %s114
      %p123 = scmp.eq.s32.totalorder %s29, 0
      %p124 = por %p122, %p123
      %p125 = scmp.ne.s32.totalorder %s113, %s114
      %p126 = scmp.eq.s32.totalorder %s30, 7
      %p127 = por %p125, %p126
      %p129 = scmp.ne.s32.totalorder %s114, %s128
      %p130 = scmp.eq.s32.totalorder %s30, 0
      %p131 = por %p129, %p130
      %s133 = sadd.s32 %s132, 1
      %p136 = scmp.eq.s32.totalorder %s24, 7
      %p137 = scmp.ne.s32.totalorder %s132, %s134
      %p138 = scmp.eq.s32.totalorder %s24, 0
      %p139 = por %p137, %p138
      %p140 = scmp.ne.s32.totalorder %s132, %s134
      %p141 = scmp.eq.s32.totalorder %s29, 7
      %p142 = por %p140, %p141
      %p143 = scmp.ne.s32.totalorder %s134, %s135
      %p144 = scmp.eq.s32.totalorder %s29, 0
      %p145 = por %p143, %p144
      %p146 = scmp.ne.s32.totalorder %s134, %s135
      %p147 = scmp.eq.s32.totalorder %s30, 7
      %p148 = por %p146, %p147
      %p150 = scmp.ne.s32.totalorder %s135, %s149
      %p151 = scmp.eq.s32.totalorder %s30, 0
      %p152 = por %p150, %p151
      %s154 = sadd.s32 %s153, 1
      %p157 = scmp.eq.s32.totalorder %s24, 7
      %p158 = scmp.ne.s32.totalorder %s153, %s155
      %p159 = scmp.eq.s32.totalorder %s24, 0
      %p160 = por %p158, %p159
      %p161 = scmp.ne.s32.totalorder %s153, %s155
      %p162 = scmp.eq.s32.totalorder %s29, 7
      %p163 = por %p161, %p162
      %p164 = scmp.ne.s32.totalorder %s155, %s156
      %p165 = scmp.eq.s32.totalorder %s29, 0
      %p166 = por %p164, %p165
      %p167 = scmp.ne.s32.totalorder %s155, %s156
      %p168 = scmp.eq.s32.totalorder %s30, 7
      %p169 = por %p167, %p168
      %p171 = scmp.ne.s32.totalorder %s156, %s170
      %p172 = scmp.eq.s32.totalorder %s30, 0
      %p173 = por %p171, %p172
      %s175 = sadd.s32 %s174, 1
      %p178 = scmp.eq.s32.totalorder %s24, 7
      %p179 = scmp.ne.s32.totalorder %s174, %s176
      %p180 = scmp.eq.s32.totalorder %s24, 0
      %p181 = por %p179, %p180
      %p182 = scmp.ne.s32.totalorder %s174, %s176
      %p183 = scmp.eq.s32.totalorder %s29, 7
      %p184 = por %p182, %p183
      %p185 = scmp.ne.s32.totalorder %s176, %s177
      %p186 = scmp.eq.s32.totalorder %s29, 0
      %p187 = por %p185, %p186
      %p188 = scmp.ne.s32.totalorder %s176, %s177
      %p189 = scmp.eq.s32.totalorder %s30, 7
      %p190 = por %p188, %p189
      %p192 = scmp.ne.s32.totalorder %s177, %s191
      %p193 = scmp.eq.s32.totalorder %s30, 0
      %p194 = por %p192, %p193
      %s196 = sadd.s32 %s195, 1
      %p199 = scmp.eq.s32.totalorder %s24, 7
      %p200 = scmp.ne.s32.totalorder %s195, %s197
      %p201 = scmp.eq.s32.totalorder %s24, 0
      %p202 = por %p200, %p201
      %p203 = scmp.ne.s32.totalorder %s195, %s197
      %p204 = scmp.eq.s32.totalorder %s29, 7
      %p205 = por %p203, %p204
      %p206 = scmp.ne.s32.totalorder %s197, %s198
      %p207 = scmp.eq.s32.totalorder %s29, 0
      %p208 = por %p206, %p207
      %p209 = scmp.ne.s32.totalorder %s197, %s198
      %p210 = scmp.eq.s32.totalorder %s30, 7
      %p211 = por %p209, %p210
      %p213 = scmp.ne.s32.totalorder %s198, %s212
      %p214 = scmp.eq.s32.totalorder %s30, 0
      %p215 = por %p213, %p214
      %s217 = sadd.s32 %s216, 1
      %p220 = scmp.eq.s32.totalorder %s24, 7
      %p221 = scmp.ne.s32.totalorder %s216, %s218
      %p222 = scmp.eq.s32.totalorder %s24, 0
      %p223 = por %p221, %p222
      %p224 = scmp.ne.s32.totalorder %s216, %s218
      %p225 = scmp.eq.s32.totalorder %s29, 7
      %p226 = por %p224, %p225
      %p227 = scmp.ne.s32.totalorder %s218, %s219
      %p228 = scmp.eq.s32.totalorder %s29, 0
      %p229 = por %p227, %p228
      %p230 = scmp.ne.s32.totalorder %s218, %s219
      %p231 = scmp.eq.s32.totalorder %s30, 7
      %p232 = por %p230, %p231
      %p234 = scmp.ne.s32.totalorder %s219, %s233
      %p235 = scmp.eq.s32.totalorder %s30, 0
      %p236 = por %p234, %p235
      %s238 = sadd.s32 %s237, 1
      %p241 = scmp.eq.s32.totalorder %s24, 7
      %p242 = scmp.ne.s32.totalorder %s237, %s239
      %p243 = scmp.eq.s32.totalorder %s24, 0
      %p244 = por %p242, %p243
      %p245 = scmp.ne.s32.totalorder %s237, %s239
      %p246 = scmp.eq.s32.totalorder %s29, 7
      %p247 = por %p245, %p246
      %p248 = scmp.ne.s32.totalorder %s239, %s240
      %p249 = scmp.eq.s32.totalorder %s29, 0
      %p250 = por %p248, %p249
      %p251 = scmp.ne.s32.totalorder %s239, %s240
      %p252 = scmp.eq.s32.totalorder %s30, 7
      %p253 = por %p251, %p252
      %p255 = scmp.ne.s32.totalorder %s240, %s254
      %p256 = scmp.eq.s32.totalorder %s30, 0
      %p257 = por %p255, %p256
      %s259 = sadd.s32 %s258, 1
      %p262 = scmp.eq.s32.totalorder %s24, 7
      %p263 = scmp.ne.s32.totalorder %s258, %s260
      %p264 = scmp.eq.s32.totalorder %s24, 0
      %p265 = por %p263, %p264
      %p266 = scmp.ne.s32.totalorder %s258, %s260
      %p267 = scmp.eq.s32.totalorder %s29, 7
      %p268 = por %p266, %p267
      %p269 = scmp.ne.s32.totalorder %s260, %s261
      %p270 = scmp.eq.s32.totalorder %s29, 0
      %p271 = por %p269, %p270
      %p272 = scmp.ne.s32.totalorder %s260, %s261
      %p273 = scmp.eq.s32.totalorder %s30, 7
      %p274 = por %p272, %p273
      %p276 = scmp.ne.s32.totalorder %s261, %s275
      %p277 = scmp.eq.s32.totalorder %s30, 0
      %p278 = por %p276, %p277
      %s280 = sadd.s32 %s279, 1
      %p283 = scmp.eq.s32.totalorder %s24, 7
      %p284 = scmp.ne.s32.totalorder %s279, %s281
      %p285 = scmp.eq.s32.totalorder %s24, 0
      %p286 = por %p284, %p285
      %p287 = scmp.ne.s32.totalorder %s279, %s281
      %p288 = scmp.eq.s32.totalorder %s29, 7
      %p289 = por %p287, %p288
      %p290 = scmp.ne.s32.totalorder %s281, %s282
      %p291 = scmp.eq.s32.totalorder %s29, 0
      %p292 = por %p290, %p291
      %p293 = scmp.ne.s32.totalorder %s281, %s282
      %p294 = scmp.eq.s32.totalorder %s30, 7
      %p295 = por %p293, %p294
      %p297 = scmp.ne.s32.totalorder %s282, %s296
      %p298 = scmp.eq.s32.totalorder %s30, 0
      %p299 = por %p297, %p298
      %s301 = sadd.s32 %s300, 1
      %p304 = scmp.eq.s32.totalorder %s24, 7
      %p305 = scmp.ne.s32.totalorder %s300, %s302
      %p306 = scmp.eq.s32.totalorder %s24, 0
      %p307 = por %p305, %p306
      %p308 = scmp.ne.s32.totalorder %s300, %s302
      %p309 = scmp.eq.s32.totalorder %s29, 7
      %p310 = por %p308, %p309
      %p311 = scmp.ne.s32.totalorder %s302, %s303
      %p312 = scmp.eq.s32.totalorder %s29, 0
      %p313 = por %p311, %p312
      %p314 = scmp.ne.s32.totalorder %s302, %s303
      %p315 = scmp.eq.s32.totalorder %s30, 7
      %p316 = por %p314, %p315
      %p318 = scmp.ne.s32.totalorder %s303, %s317
      %p319 = scmp.eq.s32.totalorder %s30, 0
      %p320 = por %p318, %p319
      %s322 = sadd.s32 %s321, 1
      %p325 = scmp.eq.s32.totalorder %s24, 7
      %p326 = scmp.ne.s32.totalorder %s321, %s323
      %p327 = scmp.eq.s32.totalorder %s24, 0
      %p328 = por %p326, %p327
      %p329 = scmp.ne.s32.totalorder %s321, %s323
      %p330 = scmp.eq.s32.totalorder %s29, 7
      %p331 = por %p329, %p330
      %p332 = scmp.ne.s32.totalorder %s323, %s324
      %p333 = scmp.eq.s32.totalorder %s29, 0
      %p334 = por %p332, %p333
      %p335 = scmp.ne.s32.totalorder %s323, %s324
      %p336 = scmp.eq.s32.totalorder %s30, 7
      %p337 = por %p335, %p336
      %p339 = scmp.ne.s32.totalorder %s324, %s338
      %p340 = scmp.eq.s32.totalorder %s30, 0
      %p341 = por %p339, %p340
      %s343 = sadd.s32 %s342, 1
      %p346 = scmp.eq.s32.totalorder %s24, 7
      %p347 = scmp.ne.s32.totalorder %s342, %s344
      %p348 = scmp.eq.s32.totalorder %s24, 0
      %p349 = por %p347, %p348
      %p350 = scmp.ne.s32.totalorder %s342, %s344
      %p351 = scmp.eq.s32.totalorder %s29, 7
      %p352 = por %p350, %p351
      %p353 = scmp.ne.s32.totalorder %s344, %s345
      %p354 = scmp.eq.s32.totalorder %s29, 0
      %p355 = por %p353, %p354
      %p356 = scmp.ne.s32.totalorder %s344, %s345
      %p357 = scmp.eq.s32.totalorder %s30, 7
      %p358 = por %p356, %p357
      %p360 = scmp.ne.s32.totalorder %s345, %s359
      %p361 = scmp.eq.s32.totalorder %s30, 0
      %p362 = por %p360, %p361
      %s364 = sadd.s32 %s363, 1
      %p367 = scmp.eq.s32.totalorder %s24, 7
      %p368 = scmp.ne.s32.totalorder %s363, %s365
      %p369 = scmp.eq.s32.totalorder %s24, 0
      %p370 = por %p368, %p369
      %p371 = scmp.ne.s32.totalorder %s363, %s365
      %p372 = scmp.eq.s32.totalorder %s29, 7
      %p373 = por %p371, %p372
      %p374 = scmp.ne.s32.totalorder %s365, %s366
      %p375 = scmp.eq.s32.totalorder %s29, 0
      %p376 = por %p374, %p375
      %p377 = scmp.ne.s32.totalorder %s365, %s366
      %p378 = scmp.eq.s32.totalorder %s30, 7
      %p379 = por %p377, %p378
      %p381 = scmp.ne.s32.totalorder %s366, %s380
      %p382 = scmp.eq.s32.totalorder %s30, 0
      %p383 = por %p381, %p382
      %s384 = ssub.s32 %s31, %s50
      %s385 = ssub.s32 %s32, %s46
      %s386 = sor.u32 %s384, %s385
      %p387 = scmp.eq.s32.totalorder %s386, 0
      %s389 = sadd.s32 %s388, 1
      %s390 = scalar_select %p387, %s388, %s389
      %p393 = pneg %p387
      %p394 = scmp.eq.s32.totalorder %s24, 7
      %p395 = por %p393, %p394
      %p396 = scmp.ne.s32.totalorder %s388, %s391
      %p397 = scmp.eq.s32.totalorder %s24, 0
      %p398 = por %p396, %p397
      %p399 = scmp.ne.s32.totalorder %s388, %s391
      %p400 = scmp.eq.s32.totalorder %s29, 7
      %p401 = por %p399, %p400
      %p402 = scmp.ne.s32.totalorder %s391, %s392
      %p403 = scmp.eq.s32.totalorder %s29, 0
      %p404 = por %p402, %p403
      %p405 = scmp.ne.s32.totalorder %s391, %s392
      %p406 = scmp.eq.s32.totalorder %s30, 7
      %p407 = por %p405, %p406
      %p409 = scmp.ne.s32.totalorder %s392, %s408
      %p410 = scmp.eq.s32.totalorder %s30, 0
      %p411 = por %p409, %p410
      %p412 = scmp.le.s32.totalorder 1, %s24
      %p413 = scmp.lt.s32.totalorder %s24, 9
      %p414 = pnand %p412, %p413
      %p415 = pneg %p414
      // Predicated region
      $region9: #{tpu_custom_call.1} parent=5 // pred_check
        _
      $region10: #{tpu_custom_call.1} parent=5 // pred_check_branch
        %417 = sbr.rel (%p414) target = $region12
      $region11: #{tpu_custom_call.1} parent=5 // pred_region
        %s418 = ssub.s32 %s24, 1
        // Predicated region
        $region13: #{tpu_custom_call.1} parent=11 // pred_check
          %p419 = pneg %p124
        $region14: #{tpu_custom_call.1} parent=11 // pred_check_branch
          %421 = sbr.rel (%p419) target = $region16
        $region15: #{tpu_custom_call.1} parent=11 // pred_region
          _
        $region16: #{tpu_custom_call.1} parent=11 // pred_fallthru
          _
        // Predicated region
        $region17: #{tpu_custom_call.1} parent=11 // pred_check
          %p422 = pneg %p145
        $region18: #{tpu_custom_call.1} parent=11 // pred_check_branch
          %424 = sbr.rel (%p422) target = $region20
        $region19: #{tpu_custom_call.1} parent=11 // pred_region
          _
        $region20: #{tpu_custom_call.1} parent=11 // pred_fallthru
          _
        // Predicated region
        $region21: #{tpu_custom_call.1} parent=11 // pred_check
          %p425 = pneg %p166
        $region22: #{tpu_custom_call.1} parent=11 // pred_check_branch
          %427 = sbr.rel (%p425) target = $region24
        $region23: #{tpu_custom_call.1} parent=11 // pred_region
          _
        $region24: #{tpu_custom_call.1} parent=11 // pred_fallthru
          _
        // Predicated region
        $region25: #{tpu_custom_call.1} parent=11 // pred_check
          %p428 = pneg %p187
        $region26: #{tpu_custom_call.1} parent=11 // pred_check_branch
          %430 = sbr.rel (%p428) target = $region28
        $region27: #{tpu_custom_call.1} parent=11 // pred_region
          _
        $region28: #{tpu_custom_call.1} parent=11 // pred_fallthru
          _
        // Predicated region
        $region29: #{tpu_custom_call.1} parent=11 // pred_check
          %p431 = pneg %p208
        $region30: #{tpu_custom_call.1} parent=11 // pred_check_branch
          %433 = sbr.rel (%p431) target = $region32
        $region31: #{tpu_custom_call.1} parent=11 // pred_region
          _
        $region32: #{tpu_custom_call.1} parent=11 // pred_fallthru
          _
        // Predicated region
        $region33: #{tpu_custom_call.1} parent=11 // pred_check
          %p434 = pneg %p229
        $region34: #{tpu_custom_call.1} parent=11 // pred_check_branch
          %436 = sbr.rel (%p434) target = $region36
        $region35: #{tpu_custom_call.1} parent=11 // pred_region
          _
        $region36: #{tpu_custom_call.1} parent=11 // pred_fallthru
          _
        // Predicated region
        $region37: #{tpu_custom_call.1} parent=11 // pred_check
          %p437 = pneg %p250
        $region38: #{tpu_custom_call.1} parent=11 // pred_check_branch
          %439 = sbr.rel (%p437) target = $region40
        $region39: #{tpu_custom_call.1} parent=11 // pred_region
          _
        $region40: #{tpu_custom_call.1} parent=11 // pred_fallthru
          _
        // Predicated region
        $region41: #{tpu_custom_call.1} parent=11 // pred_check
          %p440 = pneg %p271
        $region42: #{tpu_custom_call.1} parent=11 // pred_check_branch
          %442 = sbr.rel (%p440) target = $region44
        $region43: #{tpu_custom_call.1} parent=11 // pred_region
          _
        $region44: #{tpu_custom_call.1} parent=11 // pred_fallthru
          _
        // Predicated region
        $region45: #{tpu_custom_call.1} parent=11 // pred_check
          %p443 = pneg %p292
        $region46: #{tpu_custom_call.1} parent=11 // pred_check_branch
          %445 = sbr.rel (%p443) target = $region48
        $region47: #{tpu_custom_call.1} parent=11 // pred_region
          _
        $region48: #{tpu_custom_call.1} parent=11 // pred_fallthru
          _
        // Predicated region
        $region49: #{tpu_custom_call.1} parent=11 // pred_check
          %p446 = pneg %p313
        $region50: #{tpu_custom_call.1} parent=11 // pred_check_branch
          %448 = sbr.rel (%p446) target = $region52
        $region51: #{tpu_custom_call.1} parent=11 // pred_region
          _
        $region52: #{tpu_custom_call.1} parent=11 // pred_fallthru
          _
        // Predicated region
        $region53: #{tpu_custom_call.1} parent=11 // pred_check
          %p449 = pneg %p334
        $region54: #{tpu_custom_call.1} parent=11 // pred_check_branch
          %451 = sbr.rel (%p449) target = $region56
        $region55: #{tpu_custom_call.1} parent=11 // pred_region
          _
        $region56: #{tpu_custom_call.1} parent=11 // pred_fallthru
          _
        // Predicated region
        $region57: #{tpu_custom_call.1} parent=11 // pred_check
          %p452 = pneg %p355
        $region58: #{tpu_custom_call.1} parent=11 // pred_check_branch
          %454 = sbr.rel (%p452) target = $region60
        $region59: #{tpu_custom_call.1} parent=11 // pred_region
          _
        $region60: #{tpu_custom_call.1} parent=11 // pred_fallthru
          _
        // Predicated region
        $region61: #{tpu_custom_call.1} parent=11 // pred_check
          %p455 = pneg %p376
        $region62: #{tpu_custom_call.1} parent=11 // pred_check_branch
          %457 = sbr.rel (%p455) target = $region64
        $region63: #{tpu_custom_call.1} parent=11 // pred_region
          _
        $region64: #{tpu_custom_call.1} parent=11 // pred_fallthru
          _
      $region12: #{tpu_custom_call.1} parent=5 // pred_fallthru
        _
      %p458 = scmp.lt.s32.totalorder %s24, 8
      // Predicated region
      $region65: #{tpu_custom_call.1} parent=5 // pred_check
        %p459 = pneg %p458
      $region66: #{tpu_custom_call.1} parent=5 // pred_check_branch
        %461 = sbr.rel (%p459) target = $region68
      $region67: #{tpu_custom_call.1} parent=5 // pred_region
        // Predicated region
        $region69: #{tpu_custom_call.1} parent=67 // pred_check
          %p462 = pneg %p65
        $region70: #{tpu_custom_call.1} parent=67 // pred_check_branch
          %464 = sbr.rel (%p462) target = $region72
        $region71: #{tpu_custom_call.1} parent=67 // pred_region
          %p465 = scmp.lt.s32.totalorder %s31, 1
          %s466 = scalar_select %p465, %s31, 1
          %p467 = scmp.lt.s32.totalorder %s32, 1
          %s468 = scalar_select %p467, %s32, 1
          %s469 = smul.addr %s466, 2
          %s470 = sadd.s32 %s468, %s469
          %s471 = smul.addr %s470, 8
          %s472 = scalar_lea.vmem %s0, %s471
        $region72: #{tpu_custom_call.1} parent=67 // pred_fallthru
          _
        // Predicated region
        $region73: #{tpu_custom_call.1} parent=67 // pred_check
          %p473 = pneg %p97
        $region74: #{tpu_custom_call.1} parent=67 // pred_check_branch
          %475 = sbr.rel (%p473) target = $region76
        $region75: #{tpu_custom_call.1} parent=67 // pred_region
          %p476 = scmp.eq.s32.totalorder %s32, 0
          %s477 = scalar_select %p476, %s33, 0
          %p478 = scmp.lt.s32.totalorder %s31, 1
          %s479 = scalar_select %p478, %s31, 1
          %p480 = scmp.lt.s32.totalorder %s477, 1
          %s481 = scalar_select %p480, %s477, 1
          %s482 = smul.addr %s479, 2
          %s483 = sadd.s32 %s481, %s482
          %s484 = smul.addr %s483, 8
          %s485 = scalar_lea.vmem %s1, %s484
          %p486 = scmp.eq.s32.totalorder %s32, 0
          %s487 = scalar_select %p486, %s33, 0
        $region76: #{tpu_custom_call.1} parent=67 // pred_fallthru
          _
      $region68: #{tpu_custom_call.1} parent=5 // pred_fallthru
        _
      %p488 = scmp.le.s32.totalorder 1, %s24
      %p489 = scmp.lt.s32.totalorder %s24, 9
      %p490 = pnand %p488, %p489
      %p491 = pneg %p490
      // Predicated region
      $region77: #{tpu_custom_call.1} parent=5 // pred_check
        _
      $region78: #{tpu_custom_call.1} parent=5 // pred_check_branch
        %493 = sbr.rel (%p490) target = $region80
      $region79: #{tpu_custom_call.1} parent=5 // pred_region
        %s494 = ssub.s32 %s24, 1
        %p495 = scmp.lt.s32.totalorder %s34, 1
        %s496 = scalar_select %p495, %s34, 1
        %p497 = scmp.lt.s32.totalorder %s35, 1
        %s498 = scalar_select %p497, %s35, 1
        %s499 = smul.addr %s496, 2
        %s500 = sadd.s32 %s498, %s499
        %s501 = smul.addr %s500, 8
        %s502 = scalar_lea.vmem %s0, %s501
        %p503 = pneg %p71
        %p504 = pneg %p68
        %p505 = scmp.eq.s32.totalorder %s35, 0
        %s506 = scalar_select %p505, %s36, 0
        %p507 = scmp.lt.s32.totalorder %s34, 1
        %s508 = scalar_select %p507, %s34, 1
        %p509 = scmp.lt.s32.totalorder %s506, 1
        %s510 = scalar_select %p509, %s506, 1
        %s511 = smul.addr %s508, 2
        %s512 = sadd.s32 %s510, %s511
        %s513 = smul.addr %s512, 8
        %s514 = scalar_lea.vmem %s1, %s513
        %p515 = pneg %p103
        %p516 = pneg %p100
        %p517 = pneg %p124
        %p518 = pneg %p121
        %p519 = pneg %p145
        %p520 = pneg %p142
        %p521 = pneg %p166
        %p522 = pneg %p163
        %p523 = pneg %p187
        %p524 = pneg %p184
        %p525 = pneg %p208
        %p526 = pneg %p205
        %p527 = pneg %p229
        %p528 = pneg %p226
        %p529 = pneg %p250
        %p530 = pneg %p247
        %p531 = pneg %p271
        %p532 = pneg %p268
        %p533 = pneg %p292
        %p534 = pneg %p289
        %p535 = pneg %p313
        %p536 = pneg %p310
        %p537 = pneg %p334
        %p538 = pneg %p331
        %p539 = pneg %p355
        %p540 = pneg %p352
        %p541 = pneg %p376
        %p542 = pneg %p373
        %p543 = pneg %p404
        %p544 = pneg %p401
        %s545 = sand.u32 %s391, 1
        %s546 = scalar_lea.sflag [#allocation9], %s545
        %s547 = sand.u32 %s391, 1
        %s548 = smul.addr %s547, 8
        %s549 = scalar_lea.vmem [#allocation8], %s548
        %p550 = scmp.lt.s32.totalorder %s34, 1
        %s551 = scalar_select %p550, %s34, 1
        %p552 = scmp.lt.s32.totalorder %s35, 1
        %s553 = scalar_select %p552, %s35, 1
        %s554 = smul.addr %s551, 2
        %s555 = sadd.s32 %s553, %s554
        %s556 = smul.addr %s555, 8
        %s557 = scalar_lea.vmem %s0, %s556
        %p558 = scmp.eq.s32.totalorder %s35, 0
        %s559 = scalar_select %p558, %s36, 0
        %p560 = scmp.lt.s32.totalorder %s34, 1
        %s561 = scalar_select %p560, %s34, 1
        %p562 = scmp.lt.s32.totalorder %s559, 1
        %s563 = scalar_select %p562, %s559, 1
        %s564 = smul.addr %s561, 2
        %s565 = sadd.s32 %s563, %s564
        %s566 = smul.addr %s565, 8
        %s567 = scalar_lea.vmem %s1, %s566
        %p568 = scmp.eq.s32.totalorder %s35, 0
        %s569 = scalar_select %p568, %s36, 0
        %p571 = scmp.eq.s32.totalorder %s36, 0
        // Predicated region
        $region81: #{tpu_custom_call.1} parent=79 // pred_check
          %p572 = pneg %p571
        $region82: #{tpu_custom_call.1} parent=79 // pred_check_branch
          %574 = sbr.rel (%p572) target = $region84
        $region83: #{tpu_custom_call.1} parent=79 // pred_region
          %vm575 = vcmask 7168
          %576 = vst.msk [vmem:[#allocation5] sm:$0xff] %vm575, -inf
          %577 = vst.msk [vmem:[#allocation5 + $0x8] sm:$0xff] %vm575, -inf
          %578 = vst.msk [vmem:[#allocation5 + $0x10] sm:$0xff] %vm575, -inf
          %579 = vst.msk [vmem:[#allocation5 + $0x18] sm:$0xff] %vm575, -inf
          %580 = vst.msk [vmem:[#allocation6] sm:$0xff] %vm575, 0.0
          %581 = vst.msk [vmem:[#allocation6 + $0x8] sm:$0xff] %vm575, 0.0
          %582 = vst.msk [vmem:[#allocation6 + $0x10] sm:$0xff] %vm575, 0.0
          %583 = vst.msk [vmem:[#allocation6 + $0x18] sm:$0xff] %vm575, 0.0
          %vm584 = vcmask 261120
          %585 = vst.msk [vmem:[#allocation7] sm:$0xff] %vm584, 0.0
          %v586 = vld [vmem:[%s557] sm:$0xff]
          %v587 = vld [vmem:[%s11] sm:$0x1]
          %v588 = vld [vmem:[%s12] sm:$0x1]
          %v589 = vsel %vm584, %v586, 0.0
          %590 = vadd.xlane.f32.xlu0 %v589
          %v591 = vpop.xlane.xlu0 %590
          %v592 = vrcp.pop 32.0
          %v593 = vmul.f32 %v591, %v592
          %v594 = vsub.f32 %v586, %v593
          %v595 = vmul.f32 %v594, %v594
          %v596 = vsel %vm584, %v595, 0.0
          %597 = vadd.xlane.f32.xlu0 %v596
          %v598 = vpop.xlane.xlu0 %597
          %v599 = vmul.f32 %v598, %v592
          %v600 = vadd.f32 %v599, 1e-05
          %v601 = vrsqrt.pop %v600
          %v602 = vmul.f32 %v594, %v601
          %v604 = vlaneseq
          %v605 = vshrl.u32 %v604, 7
          %v606 = vsub.s32 0, %v605
          %v607 = vrot.slane %v587, %v606
          %v609 = vmul.f32 %v602, %v607
          %v611 = vlaneseq
          %v612 = vshrl.u32 %v611, 7
          %v613 = vsub.s32 0, %v612
          %v614 = vrot.slane %v588, %v613
          %v616 = vadd.f32 %v609, %v614
          %v617 = vpack.c.bf16 %v616, %v616
          %v618 = vld [vmem:[%s2] sm:$0xf]
          %v619 = vld [vmem:[%s2 + $0x4] sm:$0xf]
          %v620 = vld [vmem:[%s2 + $0x8] sm:$0xf]
          %v621 = vld [vmem:[%s2 + $0xc] sm:$0xf]
          %v626 = vunpack.c.l.b16 %v618
          %v627 = vunpack.c.l.b16 %v619
          %v628 = vunpack.c.l.b16 %v620
          %v629 = vunpack.c.l.b16 %v621
          %v630 = vpack.c.b16 %v627, %v626
          %v631 = vpack.c.b16 %v629, %v628
          %v635 = vsel %vm584, %v617, 0
          %637 = vmatprep.subr.bf16.mxu0 0
          %638 = vmatpush1.bf16.msra.mxu0 0
          %639 = vmatprep.subr.bf16.mxu0 0
          %640 = vmatpush1.bf16.msra.mxu0 0
          %641 = vmatprep.subr.bf16.mxu0 0
          %642 = vmatpush1.bf16.msra.mxu0 0
          %643 = vmatprep.subr.bf16.mxu0 0
          %644 = vmatpush1.bf16.msra.mxu0 0
          %645 = vmatprep.subr.bf16.mxu0 0
          %646 = vmatpush1.bf16.msra.mxu0 0
          %647 = vmatprep.subr.bf16.mxu0 0
          %648 = vmatpush1.bf16.msra.mxu0 0
          %649 = vmatprep.subr.bf16.mxu0 0
          %650 = vmatpush1.bf16.msra.mxu0 %v631
          %651 = vmatprep.subr.bf16.mxu0 0
          %652 = vmatpush1.bf16.msra.mxu0 %v630
          %653 = vmatprep.subr.bf16.mxu0 0
          %654 = vmatpush2.bf16.msra.mxu0 0
          %655 = vmatprep.subr.bf16.mxu0 0
          %656 = vmatpush2.bf16.msra.mxu0 0
          %657 = vmatprep.subr.bf16.mxu0 0
          %658 = vmatpush2.bf16.msra.mxu0 0
          %659 = vmatprep.subr.bf16.mxu0 0
          %660 = vmatpush2.bf16.msra.mxu0 0
          %661 = vmatprep.subr.bf16.mxu0 0
          %662 = vmatpush2.bf16.msra.mxu0 0
          %663 = vmatprep.subr.bf16.mxu0 0
          %664 = vmatpush2.bf16.msra.mxu0 0
          %665 = vmatprep.subr.bf16.mxu0 0
          %666 = vmatpush2.bf16.msra.mxu0 0
          %667 = vmatprep.subr.bf16.mxu0 0
          %668 = vmatpush2.bf16.msra.mxu0 0
          %669 = vmatprep.mubr.bf16.mxu0 0
          %670 = vmatmul.mubr.bf16.gmra.mxu0 %v635
          %v671 = vpop.f32.mrf.mxu0
          %v672 = vadd.f32 0.0, %v671
          %v673 = vpop.f32.mrf.mxu0
          %v674 = vpop.f32.mrf.mxu0
          %v675 = vpop.f32.mrf.mxu0
          %676 = vdwg.mxu0
          %v677 = vmul.f32 %v672, 0.35355338
          %v678 = vpack.c.bf16 %v677, %v677
          %vm679 = vcmask 257024
          %680 = vst.msk [vmem:[#allocation2] sm:$0xf] %vm679, %v678
        $region84: #{tpu_custom_call.1} parent=79 // pred_fallthru
          _
        %s681 = smul.u32 %s36, 8
        %p682 = scmp.eq.s32.totalorder %s35, 0
        // Predicated region
        $region85: #{tpu_custom_call.1} parent=79 // pred_check
          %p683 = pneg %p682
        $region86: #{tpu_custom_call.1} parent=79 // pred_check_branch
          %685 = sbr.rel (%p683) target = $region88
        $region87: #{tpu_custom_call.1} parent=79 // pred_region
          %v686 = vld [vmem:[%s567] sm:$0xff]
          %v687 = vld [vmem:[%s11] sm:$0x1]
          %v688 = vld [vmem:[%s12] sm:$0x1]
          %vm689 = vcmask 261120
          %v690 = vsel %vm689, %v686, 0.0
          %691 = vadd.xlane.f32.xlu0 %v690
          %v692 = vpop.xlane.xlu0 %691
          %v693 = vrcp.pop 32.0
          %v694 = vmul.f32 %v692, %v693
          %v695 = vsub.f32 %v686, %v694
          %v696 = vmul.f32 %v695, %v695
          %v697 = vsel %vm689, %v696, 0.0
          %698 = vadd.xlane.f32.xlu0 %v697
          %v699 = vpop.xlane.xlu0 %698
          %v700 = vmul.f32 %v699, %v693
          %v701 = vadd.f32 %v700, 1e-05
          %v702 = vrsqrt.pop %v701
          %v703 = vmul.f32 %v695, %v702
          %v705 = vlaneseq
          %v706 = vshrl.u32 %v705, 7
          %v707 = vsub.s32 0, %v706
          %v708 = vrot.slane %v687, %v707
          %v710 = vmul.f32 %v703, %v708
          %v712 = vlaneseq
          %v713 = vshrl.u32 %v712, 7
          %v714 = vsub.s32 0, %v713
          %v715 = vrot.slane %v688, %v714
          %v717 = vadd.f32 %v710, %v715
          %v718 = vpack.c.bf16 %v717, %v717
          %v719 = vld [vmem:[%s3] sm:$0xf]
          %v720 = vld [vmem:[%s3 + $0x4] sm:$0xf]
          %v721 = vld [vmem:[%s3 + $0x8] sm:$0xf]
          %v722 = vld [vmem:[%s3 + $0xc] sm:$0xf]
          %v727 = vunpack.c.l.b16 %v719
          %v728 = vunpack.c.l.b16 %v720
          %v729 = vunpack.c.l.b16 %v721
          %v730 = vunpack.c.l.b16 %v722
          %v731 = vpack.c.b16 %v728, %v727
          %v732 = vpack.c.b16 %v730, %v729
          %v736 = vsel %vm689, %v718, 0
          %738 = vmatprep.subr.bf16.mxu0 0
          %739 = vmatpush1.bf16.msra.mxu0 0
          %740 = vmatprep.subr.bf16.mxu0 0
          %741 = vmatpush1.bf16.msra.mxu0 0
          %742 = vmatprep.subr.bf16.mxu0 0
          %743 = vmatpush1.bf16.msra.mxu0 0
          %744 = vmatprep.subr.bf16.mxu0 0
          %745 = vmatpush1.bf16.msra.mxu0 0
          %746 = vmatprep.subr.bf16.mxu0 0
          %747 = vmatpush1.bf16.msra.mxu0 0
          %748 = vmatprep.subr.bf16.mxu0 0
          %749 = vmatpush1.bf16.msra.mxu0 0
          %750 = vmatprep.subr.bf16.mxu0 0
          %751 = vmatpush1.bf16.msra.mxu0 %v732
          %752 = vmatprep.subr.bf16.mxu0 0
          %753 = vmatpush1.bf16.msra.mxu0 %v731
          %754 = vmatprep.subr.bf16.mxu0 0
          %755 = vmatpush2.bf16.msra.mxu0 0
          %756 = vmatprep.subr.bf16.mxu0 0
          %757 = vmatpush2.bf16.msra.mxu0 0
          %758 = vmatprep.subr.bf16.mxu0 0
          %759 = vmatpush2.bf16.msra.mxu0 0
          %760 = vmatprep.subr.bf16.mxu0 0
          %761 = vmatpush2.bf16.msra.mxu0 0
          %762 = vmatprep.subr.bf16.mxu0 0
          %763 = vmatpush2.bf16.msra.mxu0 0
          %764 = vmatprep.subr.bf16.mxu0 0
          %765 = vmatpush2.bf16.msra.mxu0 0
          %766 = vmatprep.subr.bf16.mxu0 0
          %767 = vmatpush2.bf16.msra.mxu0 0
          %768 = vmatprep.subr.bf16.mxu0 0
          %769 = vmatpush2.bf16.msra.mxu0 0
          %770 = vmatprep.mubr.bf16.mxu0 0
          %771 = vmatmul.mubr.bf16.gmra.mxu0 %v736
          %v772 = vpop.f32.mrf.mxu0
          %v773 = vadd.f32 0.0, %v772
          %v774 = vpop.f32.mrf.mxu0
          %v775 = vpop.f32.mrf.mxu0
          %v776 = vpop.f32.mrf.mxu0
          %777 = vdwg.mxu0
          %v778 = vld [vmem:[%s4] sm:$0xf]
          %v779 = vld [vmem:[%s4 + $0x4] sm:$0xf]
          %v780 = vld [vmem:[%s4 + $0x8] sm:$0xf]
          %v781 = vld [vmem:[%s4 + $0xc] sm:$0xf]
          %v786 = vunpack.c.l.b16 %v778
          %v787 = vunpack.c.l.b16 %v779
          %v788 = vunpack.c.l.b16 %v780
          %v789 = vunpack.c.l.b16 %v781
          %v790 = vpack.c.b16 %v787, %v786
          %v791 = vpack.c.b16 %v789, %v788
          %794 = vmatprep.subr.bf16.mxu0 0
          %795 = vmatpush1.bf16.msra.mxu0 0
          %796 = vmatprep.subr.bf16.mxu0 0
          %797 = vmatpush1.bf16.msra.mxu0 0
          %798 = vmatprep.subr.bf16.mxu0 0
          %799 = vmatpush1.bf16.msra.mxu0 0
          %800 = vmatprep.subr.bf16.mxu0 0
          %801 = vmatpush1.bf16.msra.mxu0 0
          %802 = vmatprep.subr.bf16.mxu0 0
          %803 = vmatpush1.bf16.msra.mxu0 0
          %804 = vmatprep.subr.bf16.mxu0 0
          %805 = vmatpush1.bf16.msra.mxu0 0
          %806 = vmatprep.subr.bf16.mxu0 0
          %807 = vmatpush1.bf16.msra.mxu0 %v791
          %808 = vmatprep.subr.bf16.mxu0 0
          %809 = vmatpush1.bf16.msra.mxu0 %v790
          %810 = vmatprep.subr.bf16.mxu0 0
          %811 = vmatpush2.bf16.msra.mxu0 0
          %812 = vmatprep.subr.bf16.mxu0 0
          %813 = vmatpush2.bf16.msra.mxu0 0
          %814 = vmatprep.subr.bf16.mxu0 0
          %815 = vmatpush2.bf16.msra.mxu0 0
          %816 = vmatprep.subr.bf16.mxu0 0
          %817 = vmatpush2.bf16.msra.mxu0 0
          %818 = vmatprep.subr.bf16.mxu0 0
          %819 = vmatpush2.bf16.msra.mxu0 0
          %820 = vmatprep.subr.bf16.mxu0 0
          %821 = vmatpush2.bf16.msra.mxu0 0
          %822 = vmatprep.subr.bf16.mxu0 0
          %823 = vmatpush2.bf16.msra.mxu0 0
          %824 = vmatprep.subr.bf16.mxu0 0
          %825 = vmatpush2.bf16.msra.mxu0 0
          %826 = vmatprep.mubr.bf16.mxu0 0
          %827 = vmatmul.mubr.bf16.gmra.mxu0 %v736
          %v828 = vpop.f32.mrf.mxu0
          %v829 = vadd.f32 0.0, %v828
          %v830 = vpop.f32.mrf.mxu0
          %v831 = vpop.f32.mrf.mxu0
          %v832 = vpop.f32.mrf.mxu0
          %833 = vdwg.mxu0
          %v834 = vpack.c.bf16 %v773, %v773
          %s835 = sshra.s32 %s681, 3
          %s836 = sand.u32 %s681, 7
          %s837 = smul.addr %s835, 4
          %s838 = scalar_lea.vmem [#allocation3], %s837
          %vm839 = vcmask 257024
          %840 = vst.msk [vmem:[%s838] sm:$0xf] %vm839, %v834
          %v841 = vpack.c.bf16 %v829, %v829
          %s842 = smul.addr %s835, 4
          %s843 = scalar_lea.vmem [#allocation4], %s842
          %844 = vst.msk [vmem:[%s843] sm:$0xf] %vm839, %v841
        $region88: #{tpu_custom_call.1} parent=79 // pred_fallthru
          _
        %s845 = sshra.s32 %s681, 3
        %s846 = sand.u32 %s681, 7
        %s847 = smul.addr %s845, 4
        %s848 = scalar_lea.vmem [#allocation3], %s847
        %v849 = vld [vmem:[%s848] sm:$0xf]
        %s850 = smul.addr %s845, 4
        %s851 = scalar_lea.vmem [#allocation4], %s850
        %v852 = vld [vmem:[%s851] sm:$0xf]
        %v853 = vld [vmem:[#allocation2] sm:$0xf]
        %vm854 = vcmask 64512
        %v856 = vsel %vm854, %v853, 0
        %v859 = vsel %vm854, %v849, 0
        %861 = vmatprep.subr.bf16.mxu0 0
        %862 = vmatpush1.bf16.xpose.msra.mxu0 0
        %863 = vmatprep.subr.bf16.mxu0 0
        %864 = vmatpush1.bf16.xpose.msra.mxu0 0
        %865 = vmatprep.subr.bf16.mxu0 0
        %866 = vmatpush1.bf16.xpose.msra.mxu0 0
        %867 = vmatprep.subr.bf16.mxu0 0
        %868 = vmatpush1.bf16.xpose.msra.mxu0 0
        %869 = vmatprep.subr.bf16.mxu0 0
        %870 = vmatpush1.bf16.xpose.msra.mxu0 0
        %871 = vmatprep.subr.bf16.mxu0 0
        %872 = vmatpush1.bf16.xpose.msra.mxu0 0
        %873 = vmatprep.subr.bf16.mxu0 0
        %874 = vmatpush1.bf16.xpose.msra.mxu0 0
        %875 = vmatprep.subr.bf16.mxu0 0
        %876 = vmatpush1.bf16.xpose.msra.mxu0 %v859
        %877 = vmatprep.subr.bf16.mxu0 0
        %878 = vmatpush2.bf16.xpose.msra.mxu0 0
        %879 = vmatprep.subr.bf16.mxu0 0
        %880 = vmatpush2.bf16.xpose.msra.mxu0 0
        %881 = vmatprep.subr.bf16.mxu0 0
        %882 = vmatpush2.bf16.xpose.msra.mxu0 0
        %883 = vmatprep.subr.bf16.mxu0 0
        %884 = vmatpush2.bf16.xpose.msra.mxu0 0
        %885 = vmatprep.subr.bf16.mxu0 0
        %886 = vmatpush2.bf16.xpose.msra.mxu0 0
        %887 = vmatprep.subr.bf16.mxu0 0
        %888 = vmatpush2.bf16.xpose.msra.mxu0 0
        %889 = vmatprep.subr.bf16.mxu0 0
        %890 = vmatpush2.bf16.xpose.msra.mxu0 0
        %891 = vmatprep.subr.bf16.mxu0 0
        %892 = vmatpush2.bf16.xpose.msra.mxu0 0
        %893 = vmatprep.mubr.bf16.mxu0 0
        %894 = vmatmul.mubr.bf16.gmra.mxu0 %v856
        %v895 = vpop.f32.mrf.mxu0
        %v896 = vadd.f32 0.0, %v895
        %v897 = vpop.f32.mrf.mxu0
        %v898 = vpop.f32.mrf.mxu0
        %v899 = vpop.f32.mrf.mxu0
        %900 = vdwg.mxu0
        %v901 = vld [vmem:[#allocation5] sm:$0xff]
        %v902 = vsel %vm854, %v896, -inf
        %903 = vmax.xlane.f32.xlu0 %v902
        %v904 = vpop.xlane.xlu0 %903
        %v905 = vmax.f32 %v901, %v904
        %v906 = vsub.f32 %v901, %v905
        %v907 = vmul.f32 %v906, 1.442695
        %v908 = vpow.pop %v907
        %910 = vset.pattern.permute.xlu0 0
        %911 = vperm.xlu0 %910, %v905
        %v912 = vpop.permute.xlu0 %911
        %v914 = vsub.f32 %v896, %v912
        %v915 = vmul.f32 %v914, 1.442695
        %v916 = vpow.pop %v915
        %v917 = vld [vmem:[#allocation6] sm:$0xff]
        %v918 = vmul.f32 %v908, %v917
        %v919 = vsel %vm854, %v916, 0.0
        %920 = vadd.xlane.f32.xlu0 %v919
        %v921 = vpop.xlane.xlu0 %920
        %v922 = vadd.f32 %v918, %v921
        %vm923 = vcmask 7168
        %924 = vst.msk [vmem:[#allocation6] sm:$0xff] %vm923, %v922
        %v925 = vpack.c.bf16 %v916, %v916
        %v927 = vsel %vm854, %v925, 0
        %vm929 = vcmask 1043456
        %v931 = vsel %vm929, %v852, 0
        %933 = vmatprep.subr.bf16.mxu0 0
        %934 = vmatpush1.bf16.msra.mxu0 0
        %935 = vmatprep.subr.bf16.mxu0 0
        %936 = vmatpush1.bf16.msra.mxu0 0
        %937 = vmatprep.subr.bf16.mxu0 0
        %938 = vmatpush1.bf16.msra.mxu0 0
        %939 = vmatprep.subr.bf16.mxu0 0
        %940 = vmatpush1.bf16.msra.mxu0 0
        %941 = vmatprep.subr.bf16.mxu0 0
        %942 = vmatpush1.bf16.msra.mxu0 0
        %943 = vmatprep.subr.bf16.mxu0 0
        %944 = vmatpush1.bf16.msra.mxu0 0
        %945 = vmatprep.subr.bf16.mxu0 0
        %946 = vmatpush1.bf16.msra.mxu0 0
        %947 = vmatprep.subr.bf16.mxu0 0
        %948 = vmatpush1.bf16.msra.mxu0 %v931
        %949 = vmatprep.subr.bf16.mxu0 0
        %950 = vmatpush2.bf16.msra.mxu0 0
        %951 = vmatprep.subr.bf16.mxu0 0
        %952 = vmatpush2.bf16.msra.mxu0 0
        %953 = vmatprep.subr.bf16.mxu0 0
        %954 = vmatpush2.bf16.msra.mxu0 0
        %955 = vmatprep.subr.bf16.mxu0 0
        %956 = vmatpush2.bf16.msra.mxu0 0
        %957 = vmatprep.subr.bf16.mxu0 0
        %958 = vmatpush2.bf16.msra.mxu0 0
        %959 = vmatprep.subr.bf16.mxu0 0
        %960 = vmatpush2.bf16.msra.mxu0 0
        %961 = vmatprep.subr.bf16.mxu0 0
        %962 = vmatpush2.bf16.msra.mxu0 0
        %963 = vmatprep.subr.bf16.mxu0 0
        %964 = vmatpush2.bf16.msra.mxu0 0
        %965 = vmatprep.mubr.bf16.mxu0 0
        %966 = vmatmul.mubr.bf16.gmra.mxu0 %v927
        %v967 = vpop.f32.mrf.mxu0
        %v968 = vadd.f32 0.0, %v967
        %v969 = vpop.f32.mrf.mxu0
        %v970 = vpop.f32.mrf.mxu0
        %v971 = vpop.f32.mrf.mxu0
        %972 = vdwg.mxu0
        %v973 = vld [vmem:[#allocation7] sm:$0xff]
        %975 = vset.pattern.permute.xlu0 0
        %976 = vperm.xlu0 %975, %v908
        %v977 = vpop.permute.xlu0 %976
        %v979 = vmul.f32 %v977, %v973
        %v980 = vadd.f32 %v979, %v968
        %981 = vst.msk [vmem:[#allocation7] sm:$0xff] %vm854, %v980
        %982 = vst.msk [vmem:[#allocation5] sm:$0xff] %vm923, %v905
        %v983 = vld [vmem:[#allocation2] sm:$0xf]
        %v985 = vunpack.c.l.b16 %v983
        %v986 = vpack.c.b16 %v985, %v985
        %987 = vrot.lane.b32.xlu0 %v986, 120
        %v988 = vpop.permute.xlu0 %987
        %v990 = vunpack.c.l.b16 %v849
        %v991 = vpack.c.b16 %v990, %v990
        %992 = vrot.lane.b32.xlu0 %v991, 120
        %v993 = vpop.permute.xlu0 %992
        %v995 = vsel %vm854, %v988, 0
        %v998 = vsel %vm854, %v993, 0
        %1000 = vmatprep.subr.bf16.mxu0 0
        %1001 = vmatpush1.bf16.xpose.msra.mxu0 0
        %1002 = vmatprep.subr.bf16.mxu0 0
        %1003 = vmatpush1.bf16.xpose.msra.mxu0 0
        %1004 = vmatprep.subr.bf16.mxu0 0
        %1005 = vmatpush1.bf16.xpose.msra.mxu0 0
        %1006 = vmatprep.subr.bf16.mxu0 0
        %1007 = vmatpush1.bf16.xpose.msra.mxu0 0
        %1008 = vmatprep.subr.bf16.mxu0 0
        %1009 = vmatpush1.bf16.xpose.msra.mxu0 0
        %1010 = vmatprep.subr.bf16.mxu0 0
        %1011 = vmatpush1.bf16.xpose.msra.mxu0 0
        %1012 = vmatprep.subr.bf16.mxu0 0
        %1013 = vmatpush1.bf16.xpose.msra.mxu0 0
        %1014 = vmatprep.subr.bf16.mxu0 0
        %1015 = vmatpush1.bf16.xpose.msra.mxu0 %v998
        %1016 = vmatprep.subr.bf16.mxu0 0
        %1017 = vmatpush2.bf16.xpose.msra.mxu0 0
        %1018 = vmatprep.subr.bf16.mxu0 0
        %1019 = vmatpush2.bf16.xpose.msra.mxu0 0
        %1020 = vmatprep.subr.bf16.mxu0 0
        %1021 = vmatpush2.bf16.xpose.msra.mxu0 0
        %1022 = vmatprep.subr.bf16.mxu0 0
        %1023 = vmatpush2.bf16.xpose.msra.mxu0 0
        %1024 = vmatprep.subr.bf16.mxu0 0
        %1025 = vmatpush2.bf16.xpose.msra.mxu0 0
        %1026 = vmatprep.subr.bf16.mxu0 0
        %1027 = vmatpush2.bf16.xpose.msra.mxu0 0
        %1028 = vmatprep.subr.bf16.mxu0 0
        %1029 = vmatpush2.bf16.xpose.msra.mxu0 0
        %1030 = vmatprep.subr.bf16.mxu0 0
        %1031 = vmatpush2.bf16.xpose.msra.mxu0 0
        %1032 = vmatprep.mubr.bf16.mxu0 0
        %1033 = vmatmul.mubr.bf16.gmra.mxu0 %v995
        %v1034 = vpop.f32.mrf.mxu0
        %v1035 = vadd.f32 0.0, %v1034
        %v1036 = vpop.f32.mrf.mxu0
        %v1037 = vpop.f32.mrf.mxu0
        %v1038 = vpop.f32.mrf.mxu0
        %1039 = vdwg.mxu0
        %s1040 = scalar_lea.vmem [#allocation5], 8
        %v1041 = vld [vmem:[%s1040] sm:$0xff]
        %v1042 = vsel %vm854, %v1035, -inf
        %1043 = vmax.xlane.f32.xlu0 %v1042
        %v1044 = vpop.xlane.xlu0 %1043
        %v1045 = vmax.f32 %v1041, %v1044
        %v1046 = vsub.f32 %v1041, %v1045
        %v1047 = vmul.f32 %v1046, 1.442695
        %v1048 = vpow.pop %v1047
        %1050 = vset.pattern.permute.xlu0 0
        %1051 = vperm.xlu0 %1050, %v1045
        %v1052 = vpop.permute.xlu0 %1051
        %v1054 = vsub.f32 %v1035, %v1052
        %v1055 = vmul.f32 %v1054, 1.442695
        %v1056 = vpow.pop %v1055
        %s1057 = scalar_lea.vmem [#allocation6], 8
        %v1058 = vld [vmem:[%s1057] sm:$0xff]
        %v1059 = vmul.f32 %v1048, %v1058
        %v1060 = vsel %vm854, %v1056, 0.0
        %1061 = vadd.xlane.f32.xlu0 %v1060
        %v1062 = vpop.xlane.xlu0 %1061
        %v1063 = vadd.f32 %v1059, %v1062
        %1064 = vst.msk [vmem:[%s1057] sm:$0xff] %vm923, %v1063
        %v1065 = vpack.c.bf16 %v1056, %v1056
        %v1067 = vunpack.c.l.b16 %v852
        %v1068 = vpack.c.b16 %v1067, %v1067
        %1069 = vrot.lane.b32.xlu0 %v1068, 120
        %v1070 = vpop.permute.xlu0 %1069
        %v1072 = vsel %vm854, %v1065, 0
        %v1075 = vsel %vm929, %v1070, 0
        %1077 = vmatprep.subr.bf16.mxu0 0
        %1078 = vmatpush1.bf16.msra.mxu0 0
        %1079 = vmatprep.subr.bf16.mxu0 0
        %1080 = vmatpush1.bf16.msra.mxu0 0
        %1081 = vmatprep.subr.bf16.mxu0 0
        %1082 = vmatpush1.bf16.msra.mxu0 0
        %1083 = vmatprep.subr.bf16.mxu0 0
        %1084 = vmatpush1.bf16.msra.mxu0 0
        %1085 = vmatprep.subr.bf16.mxu0 0
        %1086 = vmatpush1.bf16.msra.mxu0 0
        %1087 = vmatprep.subr.bf16.mxu0 0
        %1088 = vmatpush1.bf16.msra.mxu0 0
        %1089 = vmatprep.subr.bf16.mxu0 0
        %1090 = vmatpush1.bf16.msra.mxu0 0
        %1091 = vmatprep.subr.bf16.mxu0 0
        %1092 = vmatpush1.bf16.msra.mxu0 %v1075
        %1093 = vmatprep.subr.bf16.mxu0 0
        %1094 = vmatpush2.bf16.msra.mxu0 0
        %1095 = vmatprep.subr.bf16.mxu0 0
        %1096 = vmatpush2.bf16.msra.mxu0 0
        %1097 = vmatprep.subr.bf16.mxu0 0
        %1098 = vmatpush2.bf16.msra.mxu0 0
        %1099 = vmatprep.subr.bf16.mxu0 0
        %1100 = vmatpush2.bf16.msra.mxu0 0
        %1101 = vmatprep.subr.bf16.mxu0 0
        %1102 = vmatpush2.bf16.msra.mxu0 0
        %1103 = vmatprep.subr.bf16.mxu0 0
        %1104 = vmatpush2.bf16.msra.mxu0 0
        %1105 = vmatprep.subr.bf16.mxu0 0
        %1106 = vmatpush2.bf16.msra.mxu0 0
        %1107 = vmatprep.subr.bf16.mxu0 0
        %1108 = vmatpush2.bf16.msra.mxu0 0
        %1109 = vmatprep.mubr.bf16.mxu0 0
        %1110 = vmatmul.mubr.bf16.gmra.mxu0 %v1072
        %v1111 = vpop.f32.mrf.mxu0
        %v1112 = vadd.f32 0.0, %v1111
        %v1113 = vpop.f32.mrf.mxu0
        %v1114 = vpop.f32.mrf.mxu0
        %v1115 = vpop.f32.mrf.mxu0
        %1116 = vdwg.mxu0
        %v1117 = vld [vmem:[#allocation7] sm:$0xff]
        %1119 = vset.pattern.permute.xlu0 0
        %1120 = vperm.xlu0 %1119, %v1048
        %v1121 = vpop.permute.xlu0 %1120
        %v1123 = vmul.f32 %v1121, %v1117
        %1125 = vrot.lane.b32.xlu0 %v1112, 8
        %v1126 = vpop.permute.xlu0 %1125
        %v1128 = vadd.f32 %v1123, %v1126
        %vm1129 = vcmask 130112
        %1130 = vst.msk [vmem:[#allocation7] sm:$0xff] %vm1129, %v1128
        %1131 = vst.msk [vmem:[%s1040] sm:$0xff] %vm923, %v1045
        %v1132 = vld [vmem:[#allocation2] sm:$0xf]
        %v1134 = vunpack.c.l.b16 %v1132
        %v1135 = vpack.c.b16 %v1134, %v1134
        %1136 = vrot.lane.b32.xlu0 %v1135, 112
        %v1137 = vpop.permute.xlu0 %1136
        %1138 = vrot.lane.b32.xlu0 %v991, 112
        %v1139 = vpop.permute.xlu0 %1138
        %v1141 = vsel %vm854, %v1137, 0
        %v1144 = vsel %vm854, %v1139, 0
        %1146 = vmatprep.subr.bf16.mxu0 0
        %1147 = vmatpush1.bf16.xpose.msra.mxu0 0
        %1148 = vmatprep.subr.bf16.mxu0 0
        %1149 = vmatpush1.bf16.xpose.msra.mxu0 0
        %1150 = vmatprep.subr.bf16.mxu0 0
        %1151 = vmatpush1.bf16.xpose.msra.mxu0 0
        %1152 = vmatprep.subr.bf16.mxu0 0
        %1153 = vmatpush1.bf16.xpose.msra.mxu0 0
        %1154 = vmatprep.subr.bf16.mxu0 0
        %1155 = vmatpush1.bf16.xpose.msra.mxu0 0
        %1156 = vmatprep.subr.bf16.mxu0 0
        %1157 = vmatpush1.bf16.xpose.msra.mxu0 0
        %1158 = vmatprep.subr.bf16.mxu0 0
        %1159 = vmatpush1.bf16.xpose.msra.mxu0 0
        %1160 = vmatprep.subr.bf16.mxu0 0
        %1161 = vmatpush1.bf16.xpose.msra.mxu0 %v1144
        %1162 = vmatprep.subr.bf16.mxu0 0
        %1163 = vmatpush2.bf16.xpose.msra.mxu0 0
        %1164 = vmatprep.subr.bf16.mxu0 0
        %1165 = vmatpush2.bf16.xpose.msra.mxu0 0
        %1166 = vmatprep.subr.bf16.mxu0 0
        %1167 = vmatpush2.bf16.xpose.msra.mxu0 0
        %1168 = vmatprep.subr.bf16.mxu0 0
        %1169 = vmatpush2.bf16.xpose.msra.mxu0 0
        %1170 = vmatprep.subr.bf16.mxu0 0
        %1171 = vmatpush2.bf16.xpose.msra.mxu0 0
        %1172 = vmatprep.subr.bf16.mxu0 0
        %1173 = vmatpush2.bf16.xpose.msra.mxu0 0
        %1174 = vmatprep.subr.bf16.mxu0 0
        %1175 = vmatpush2.bf16.xpose.msra.mxu0 0
        %1176 = vmatprep.subr.bf16.mxu0 0
        %1177 = vmatpush2.bf16.xpose.msra.mxu0 0
        %1178 = vmatprep.mubr.bf16.mxu0 0
        %1179 = vmatmul.mubr.bf16.gmra.mxu0 %v1141
        %v1180 = vpop.f32.mrf.mxu0
        %v1181 = vadd.f32 0.0, %v1180
        %v1182 = vpop.f32.mrf.mxu0
        %v1183 = vpop.f32.mrf.mxu0
        %v1184 = vpop.f32.mrf.mxu0
        %1185 = vdwg.mxu0
        %s1186 = scalar_lea.vmem [#allocation5], 16
        %v1187 = vld [vmem:[%s1186] sm:$0xff]
        %v1188 = vsel %vm854, %v1181, -inf
        %1189 = vmax.xlane.f32.xlu0 %v1188
        %v1190 = vpop.xlane.xlu0 %1189
        %v1191 = vmax.f32 %v1187, %v1190
        %v1192 = vsub.f32 %v1187, %v1191
        %v1193 = vmul.f32 %v1192, 1.442695
        %v1194 = vpow.pop %v1193
        %1196 = vset.pattern.permute.xlu0 0
        %1197 = vperm.xlu0 %1196, %v1191
        %v1198 = vpop.permute.xlu0 %1197
        %v1200 = vsub.f32 %v1181, %v1198
        %v1201 = vmul.f32 %v1200, 1.442695
        %v1202 = vpow.pop %v1201
        %s1203 = scalar_lea.vmem [#allocation6], 16
        %v1204 = vld [vmem:[%s1203] sm:$0xff]
        %v1205 = vmul.f32 %v1194, %v1204
        %v1206 = vsel %vm854, %v1202, 0.0
        %1207 = vadd.xlane.f32.xlu0 %v1206
        %v1208 = vpop.xlane.xlu0 %1207
        %v1209 = vadd.f32 %v1205, %v1208
        %1210 = vst.msk [vmem:[%s1203] sm:$0xff] %vm923, %v1209
        %v1211 = vpack.c.bf16 %v1202, %v1202
        %1212 = vrot.lane.b32.xlu0 %v1068, 112
        %v1213 = vpop.permute.xlu0 %1212
        %v1215 = vsel %vm854, %v1211, 0
        %v1218 = vsel %vm929, %v1213, 0
        %1220 = vmatprep.subr.bf16.mxu0 0
        %1221 = vmatpush1.bf16.msra.mxu0 0
        %1222 = vmatprep.subr.bf16.mxu0 0
        %1223 = vmatpush1.bf16.msra.mxu0 0
        %1224 = vmatprep.subr.bf16.mxu0 0
        %1225 = vmatpush1.bf16.msra.mxu0 0
        %1226 = vmatprep.subr.bf16.mxu0 0
        %1227 = vmatpush1.bf16.msra.mxu0 0
        %1228 = vmatprep.subr.bf16.mxu0 0
        %1229 = vmatpush1.bf16.msra.mxu0 0
        %1230 = vmatprep.subr.bf16.mxu0 0
        %1231 = vmatpush1.bf16.msra.mxu0 0
        %1232 = vmatprep.subr.bf16.mxu0 0
        %1233 = vmatpush1.bf16.msra.mxu0 0
        %1234 = vmatprep.subr.bf16.mxu0 0
        %1235 = vmatpush1.bf16.msra.mxu0 %v1218
        %1236 = vmatprep.subr.bf16.mxu0 0
        %1237 = vmatpush2.bf16.msra.mxu0 0
        %1238 = vmatprep.subr.bf16.mxu0 0
        %1239 = vmatpush2.bf16.msra.mxu0 0
        %1240 = vmatprep.subr.bf16.mxu0 0
        %1241 = vmatpush2.bf16.msra.mxu0 0
        %1242 = vmatprep.subr.bf16.mxu0 0
        %1243 = vmatpush2.bf16.msra.mxu0 0
        %1244 = vmatprep.subr.bf16.mxu0 0
        %1245 = vmatpush2.bf16.msra.mxu0 0
        %1246 = vmatprep.subr.bf16.mxu0 0
        %1247 = vmatpush2.bf16.msra.mxu0 0
        %1248 = vmatprep.subr.bf16.mxu0 0
        %1249 = vmatpush2.bf16.msra.mxu0 0
        %1250 = vmatprep.subr.bf16.mxu0 0
        %1251 = vmatpush2.bf16.msra.mxu0 0
        %1252 = vmatprep.mubr.bf16.mxu0 0
        %1253 = vmatmul.mubr.bf16.gmra.mxu0 %v1215
        %v1254 = vpop.f32.mrf.mxu0
        %v1255 = vadd.f32 0.0, %v1254
        %v1256 = vpop.f32.mrf.mxu0
        %v1257 = vpop.f32.mrf.mxu0
        %v1258 = vpop.f32.mrf.mxu0
        %1259 = vdwg.mxu0
        %v1260 = vld [vmem:[#allocation7] sm:$0xff]
        %1262 = vset.pattern.permute.xlu0 0
        %1263 = vperm.xlu0 %1262, %v1194
        %v1264 = vpop.permute.xlu0 %1263
        %v1266 = vmul.f32 %v1264, %v1260
        %1268 = vrot.lane.b32.xlu0 %v1255, 16
        %v1269 = vpop.permute.xlu0 %1268
        %v1271 = vadd.f32 %v1266, %v1269
        %vm1272 = vcmask 195712
        %1273 = vst.msk [vmem:[#allocation7] sm:$0xff] %vm1272, %v1271
        %1274 = vst.msk [vmem:[%s1186] sm:$0xff] %vm923, %v1191
        %v1275 = vld [vmem:[#allocation2] sm:$0xf]
        %v1277 = vunpack.c.l.b16 %v1275
        %v1278 = vpack.c.b16 %v1277, %v1277
        %1279 = vrot.lane.b32.xlu0 %v1278, 104
        %v1280 = vpop.permute.xlu0 %1279
        %1281 = vrot.lane.b32.xlu0 %v991, 104
        %v1282 = vpop.permute.xlu0 %1281
        %v1284 = vsel %vm854, %v1280, 0
        %v1287 = vsel %vm854, %v1282, 0
        %1289 = vmatprep.subr.bf16.mxu0 0
        %1290 = vmatpush1.bf16.xpose.msra.mxu0 0
        %1291 = vmatprep.subr.bf16.mxu0 0
        %1292 = vmatpush1.bf16.xpose.msra.mxu0 0
        %1293 = vmatprep.subr.bf16.mxu0 0
        %1294 = vmatpush1.bf16.xpose.msra.mxu0 0
        %1295 = vmatprep.subr.bf16.mxu0 0
        %1296 = vmatpush1.bf16.xpose.msra.mxu0 0
        %1297 = vmatprep.subr.bf16.mxu0 0
        %1298 = vmatpush1.bf16.xpose.msra.mxu0 0
        %1299 = vmatprep.subr.bf16.mxu0 0
        %1300 = vmatpush1.bf16.xpose.msra.mxu0 0
        %1301 = vmatprep.subr.bf16.mxu0 0
        %1302 = vmatpush1.bf16.xpose.msra.mxu0 0
        %1303 = vmatprep.subr.bf16.mxu0 0
        %1304 = vmatpush1.bf16.xpose.msra.mxu0 %v1287
        %1305 = vmatprep.subr.bf16.mxu0 0
        %1306 = vmatpush2.bf16.xpose.msra.mxu0 0
        %1307 = vmatprep.subr.bf16.mxu0 0
        %1308 = vmatpush2.bf16.xpose.msra.mxu0 0
        %1309 = vmatprep.subr.bf16.mxu0 0
        %1310 = vmatpush2.bf16.xpose.msra.mxu0 0
        %1311 = vmatprep.subr.bf16.mxu0 0
        %1312 = vmatpush2.bf16.xpose.msra.mxu0 0
        %1313 = vmatprep.subr.bf16.mxu0 0
        %1314 = vmatpush2.bf16.xpose.msra.mxu0 0
        %1315 = vmatprep.subr.bf16.mxu0 0
        %1316 = vmatpush2.bf16.xpose.msra.mxu0 0
        %1317 = vmatprep.subr.bf16.mxu0 0
        %1318 = vmatpush2.bf16.xpose.msra.mxu0 0
        %1319 = vmatprep.subr.bf16.mxu0 0
        %1320 = vmatpush2.bf16.xpose.msra.mxu0 0
        %1321 = vmatprep.mubr.bf16.mxu0 0
        %1322 = vmatmul.mubr.bf16.gmra.mxu0 %v1284
        %v1323 = vpop.f32.mrf.mxu0
        %v1324 = vadd.f32 0.0, %v1323
        %v1325 = vpop.f32.mrf.mxu0
        %v1326 = vpop.f32.mrf.mxu0
        %v1327 = vpop.f32.mrf.mxu0
        %1328 = vdwg.mxu0
        %s1329 = scalar_lea.vmem [#allocation5], 24
        %v1330 = vld [vmem:[%s1329] sm:$0xff]
        %v1331 = vsel %vm854, %v1324, -inf
        %1332 = vmax.xlane.f32.xlu0 %v1331
        %v1333 = vpop.xlane.xlu0 %1332
        %v1334 = vmax.f32 %v1330, %v1333
        %v1335 = vsub.f32 %v1330, %v1334
        %v1336 = vmul.f32 %v1335, 1.442695
        %v1337 = vpow.pop %v1336
        %1339 = vset.pattern.permute.xlu0 0
        %1340 = vperm.xlu0 %1339, %v1334
        %v1341 = vpop.permute.xlu0 %1340
        %v1343 = vsub.f32 %v1324, %v1341
        %v1344 = vmul.f32 %v1343, 1.442695
        %v1345 = vpow.pop %v1344
        %s1346 = scalar_lea.vmem [#allocation6], 24
        %v1347 = vld [vmem:[%s1346] sm:$0xff]
        %v1348 = vmul.f32 %v1337, %v1347
        %v1349 = vsel %vm854, %v1345, 0.0
        %1350 = vadd.xlane.f32.xlu0 %v1349
        %v1351 = vpop.xlane.xlu0 %1350
        %v1352 = vadd.f32 %v1348, %v1351
        %1353 = vst.msk [vmem:[%s1346] sm:$0xff] %vm923, %v1352
        %v1354 = vpack.c.bf16 %v1345, %v1345
        %1355 = vrot.lane.b32.xlu0 %v1068, 104
        %v1356 = vpop.permute.xlu0 %1355
        %v1358 = vsel %vm854, %v1354, 0
        %v1361 = vsel %vm929, %v1356, 0
        %1363 = vmatprep.subr.bf16.mxu0 0
        %1364 = vmatpush1.bf16.msra.mxu0 0
        %1365 = vmatprep.subr.bf16.mxu0 0
        %1366 = vmatpush1.bf16.msra.mxu0 0
        %1367 = vmatprep.subr.bf16.mxu0 0
        %1368 = vmatpush1.bf16.msra.mxu0 0
        %1369 = vmatprep.subr.bf16.mxu0 0
        %1370 = vmatpush1.bf16.msra.mxu0 0
        %1371 = vmatprep.subr.bf16.mxu0 0
        %1372 = vmatpush1.bf16.msra.mxu0 0
        %1373 = vmatprep.subr.bf16.mxu0 0
        %1374 = vmatpush1.bf16.msra.mxu0 0
        %1375 = vmatprep.subr.bf16.mxu0 0
        %1376 = vmatpush1.bf16.msra.mxu0 0
        %1377 = vmatprep.subr.bf16.mxu0 0
        %1378 = vmatpush1.bf16.msra.mxu0 %v1361
        %1379 = vmatprep.subr.bf16.mxu0 0
        %1380 = vmatpush2.bf16.msra.mxu0 0
        %1381 = vmatprep.subr.bf16.mxu0 0
        %1382 = vmatpush2.bf16.msra.mxu0 0
        %1383 = vmatprep.subr.bf16.mxu0 0
        %1384 = vmatpush2.bf16.msra.mxu0 0
        %1385 = vmatprep.subr.bf16.mxu0 0
        %1386 = vmatpush2.bf16.msra.mxu0 0
        %1387 = vmatprep.subr.bf16.mxu0 0
        %1388 = vmatpush2.bf16.msra.mxu0 0
        %1389 = vmatprep.subr.bf16.mxu0 0
        %1390 = vmatpush2.bf16.msra.mxu0 0
        %1391 = vmatprep.subr.bf16.mxu0 0
        %1392 = vmatpush2.bf16.msra.mxu0 0
        %1393 = vmatprep.subr.bf16.mxu0 0
        %1394 = vmatpush2.bf16.msra.mxu0 0
        %1395 = vmatprep.mubr.bf16.mxu0 0
        %1396 = vmatmul.mubr.bf16.gmra.mxu0 %v1358
        %v1397 = vpop.f32.mrf.mxu0
        %v1398 = vadd.f32 0.0, %v1397
        %v1399 = vpop.f32.mrf.mxu0
        %v1400 = vpop.f32.mrf.mxu0
        %v1401 = vpop.f32.mrf.mxu0
        %1402 = vdwg.mxu0
        %v1403 = vld [vmem:[#allocation7] sm:$0xff]
        %1405 = vset.pattern.permute.xlu0 0
        %1406 = vperm.xlu0 %1405, %v1337
        %v1407 = vpop.permute.xlu0 %1406
        %v1409 = vmul.f32 %v1407, %v1403
        %1411 = vrot.lane.b32.xlu0 %v1398, 24
        %v1412 = vpop.permute.xlu0 %1411
        %v1414 = vadd.f32 %v1409, %v1412
        %vm1415 = vcmask 261312
        %1416 = vst.msk [vmem:[#allocation7] sm:$0xff] %vm1415, %v1414
        %1417 = vst.msk [vmem:[%s1329] sm:$0xff] %vm923, %v1334
        %p1418 = scmp.eq.s32.totalorder %s36, 1
        // Predicated region
        $region89: #{tpu_custom_call.1} parent=79 // pred_check
          %p1419 = pneg %p1418
        $region90: #{tpu_custom_call.1} parent=79 // pred_check_branch
          %1421 = sbr.rel (%p1419) target = $region92
        $region91: #{tpu_custom_call.1} parent=79 // pred_region
          %v1422 = vld [vmem:[#allocation6] sm:$0xff]
          %v1423 = vrcp.pop %v1422
          %v1424 = vld [vmem:[#allocation7] sm:$0xff]
          %1426 = vset.pattern.permute.xlu0 0
          %1427 = vperm.xlu0 %1426, %v1423
          %v1428 = vpop.permute.xlu0 %1427
          %v1430 = vmul.f32 %v1424, %v1428
          %1431 = vst.msk [vmem:[#allocation7] sm:$0xff] %vm854, %v1430
          %v1432 = vld [vmem:[%s1057] sm:$0xff]
          %v1433 = vrcp.pop %v1432
          %v1434 = vld [vmem:[#allocation7] sm:$0xff]
          %1436 = vset.pattern.permute.xlu0 0
          %1437 = vperm.xlu0 %1436, %v1433
          %v1438 = vpop.permute.xlu0 %1437
          %v1440 = vmul.f32 %v1434, %v1438
          %1441 = vst.msk [vmem:[#allocation7] sm:$0xff] %vm1129, %v1440
          %v1442 = vld [vmem:[%s1203] sm:$0xff]
          %v1443 = vrcp.pop %v1442
          %v1444 = vld [vmem:[#allocation7] sm:$0xff]
          %1446 = vset.pattern.permute.xlu0 0
          %1447 = vperm.xlu0 %1446, %v1443
          %v1448 = vpop.permute.xlu0 %1447
          %v1450 = vmul.f32 %v1444, %v1448
          %1451 = vst.msk [vmem:[#allocation7] sm:$0xff] %vm1272, %v1450
          %v1452 = vld [vmem:[%s1346] sm:$0xff]
          %v1453 = vrcp.pop %v1452
          %v1454 = vld [vmem:[#allocation7] sm:$0xff]
          %1456 = vset.pattern.permute.xlu0 0
          %1457 = vperm.xlu0 %1456, %v1453
          %v1458 = vpop.permute.xlu0 %1457
          %v1460 = vmul.f32 %v1454, %v1458
          %1461 = vst.msk [vmem:[#allocation7] sm:$0xff] %vm1415, %v1460
          %v1462 = vld [vmem:[#allocation7] sm:$0xff]
          %v1463 = vpack.c.bf16 %v1462, %v1462
          %v1464 = vld [vmem:[%s5] sm:$0xf]
          %v1465 = vld [vmem:[%s5 + $0x4] sm:$0xf]
          %v1466 = vld [vmem:[%s5 + $0x8] sm:$0xf]
          %v1467 = vld [vmem:[%s5 + $0xc] sm:$0xf]
          %v1468 = vld [vmem:[%s6] sm:$0x1]
          %v1470 = vlaneseq
          %v1471 = vshrl.u32 %v1470, 7
          %v1472 = vsub.s32 0, %v1471
          %v1473 = vrot.slane %v1468, %v1472
          %v1479 = vunpack.c.l.b16 %v1464
          %v1480 = vunpack.c.l.b16 %v1465
          %v1481 = vunpack.c.l.b16 %v1466
          %v1482 = vunpack.c.l.b16 %v1467
          %v1483 = vpack.c.b16 %v1480, %v1479
          %v1484 = vpack.c.b16 %v1482, %v1481
          %vm1487 = vcmask 261120
          %v1489 = vsel %vm1487, %v1463, 0
          %1491 = vmatprep.subr.bf16.mxu0 0
          %1492 = vmatpush1.bf16.msra.mxu0 0
          %1493 = vmatprep.subr.bf16.mxu0 0
          %1494 = vmatpush1.bf16.msra.mxu0 0
          %1495 = vmatprep.subr.bf16.mxu0 0
          %1496 = vmatpush1.bf16.msra.mxu0 0
          %1497 = vmatprep.subr.bf16.mxu0 0
          %1498 = vmatpush1.bf16.msra.mxu0 0
          %1499 = vmatprep.subr.bf16.mxu0 0
          %1500 = vmatpush1.bf16.msra.mxu0 0
          %1501 = vmatprep.subr.bf16.mxu0 0
          %1502 = vmatpush1.bf16.msra.mxu0 0
          %1503 = vmatprep.subr.bf16.mxu0 0
          %1504 = vmatpush1.bf16.msra.mxu0 %v1484
          %1505 = vmatprep.subr.bf16.mxu0 0
          %1506 = vmatpush1.bf16.msra.mxu0 %v1483
          %1507 = vmatprep.subr.bf16.mxu0 0
          %1508 = vmatpush2.bf16.msra.mxu0 0
          %1509 = vmatprep.subr.bf16.mxu0 0
          %1510 = vmatpush2.bf16.msra.mxu0 0
          %1511 = vmatprep.subr.bf16.mxu0 0
          %1512 = vmatpush2.bf16.msra.mxu0 0
          %1513 = vmatprep.subr.bf16.mxu0 0
          %1514 = vmatpush2.bf16.msra.mxu0 0
          %1515 = vmatprep.subr.bf16.mxu0 0
          %1516 = vmatpush2.bf16.msra.mxu0 0
          %1517 = vmatprep.subr.bf16.mxu0 0
          %1518 = vmatpush2.bf16.msra.mxu0 0
          %1519 = vmatprep.subr.bf16.mxu0 0
          %1520 = vmatpush2.bf16.msra.mxu0 0
          %1521 = vmatprep.subr.bf16.mxu0 0
          %1522 = vmatpush2.bf16.msra.mxu0 0
          %1523 = vmatprep.mubr.bf16.mxu0 0
          %1524 = vmatmul.mubr.bf16.gmra.mxu0 %v1489
          %v1525 = vpop.f32.mrf.mxu0
          %v1526 = vadd.f32 %v1473, %v1525
          %v1527 = vpop.f32.mrf.mxu0
          %v1528 = vpop.f32.mrf.mxu0
          %v1529 = vpop.f32.mrf.mxu0
          %1530 = vdwg.mxu0
          %v1531 = vld [vmem:[%s557] sm:$0xff]
          %v1532 = vadd.f32 %v1531, %v1526
          %v1533 = vld [vmem:[%s13] sm:$0x1]
          %v1534 = vld [vmem:[%s14] sm:$0x1]
          %v1535 = vsel %vm1487, %v1532, 0.0
          %1536 = vadd.xlane.f32.xlu0 %v1535
          %v1537 = vpop.xlane.xlu0 %1536
          %v1538 = vrcp.pop 32.0
          %v1539 = vmul.f32 %v1537, %v1538
          %v1540 = vsub.f32 %v1532, %v1539
          %v1541 = vmul.f32 %v1540, %v1540
          %v1542 = vsel %vm1487, %v1541, 0.0
          %1543 = vadd.xlane.f32.xlu0 %v1542
          %v1544 = vpop.xlane.xlu0 %1543
          %v1545 = vmul.f32 %v1544, %v1538
          %v1546 = vadd.f32 %v1545, 1e-05
          %v1547 = vrsqrt.pop %v1546
          %v1548 = vmul.f32 %v1540, %v1547
          %v1550 = vlaneseq
          %v1551 = vshrl.u32 %v1550, 7
          %v1552 = vsub.s32 0, %v1551
          %v1553 = vrot.slane %v1533, %v1552
          %v1555 = vmul.f32 %v1548, %v1553
          %v1557 = vlaneseq
          %v1558 = vshrl.u32 %v1557, 7
          %v1559 = vsub.s32 0, %v1558
          %v1560 = vrot.slane %v1534, %v1559
          %v1562 = vadd.f32 %v1555, %v1560
          %v1563 = vpack.c.bf16 %v1562, %v1562
          %v1564 = vld [vmem:[%s7] sm:$0xff]
          %v1565 = vld [vmem:[%s7 + $0x8] sm:$0xff]
          %v1566 = vld [vmem:[%s7 + $0x10] sm:$0xff]
          %v1567 = vld [vmem:[%s7 + $0x18] sm:$0xff]
          %v1568 = vld [vmem:[%s8] sm:$0x3]
          %v1570 = vlaneseq
          %v1571 = vshrl.u32 %v1570, 7
          %v1572 = vsub.s32 0, %v1571
          %v1573 = vrot.slane %v1568, %v1572
          %v1574 = vlaneseq
          %v1575 = vshrl.u32 %v1574, 7
          %v1576 = vsub.s32 1, %v1575
          %v1577 = vrot.slane %v1568, %v1576
          %v1584 = vunpack.c.l.b16 %v1564
          %v1585 = vunpack.c.h.b16 %v1564
          %v1586 = vunpack.c.l.b16 %v1565
          %v1587 = vunpack.c.h.b16 %v1565
          %v1588 = vunpack.c.l.b16 %v1566
          %v1589 = vunpack.c.h.b16 %v1566
          %v1590 = vunpack.c.l.b16 %v1567
          %v1591 = vunpack.c.h.b16 %v1567
          %v1592 = vpack.c.b16 %v1586, %v1584
          %v1593 = vpack.c.b16 %v1587, %v1585
          %v1594 = vpack.c.b16 %v1590, %v1588
          %v1595 = vpack.c.b16 %v1591, %v1589
          %v1601 = vsel %vm1487, %v1563, 0
          %1603 = vmatprep.subr.bf16.mxu0 0
          %1604 = vmatpush1.bf16.msra.mxu0 0
          %1605 = vmatprep.subr.bf16.mxu0 0
          %1606 = vmatpush1.bf16.msra.mxu0 0
          %1607 = vmatprep.subr.bf16.mxu0 0
          %1608 = vmatpush1.bf16.msra.mxu0 0
          %1609 = vmatprep.subr.bf16.mxu0 0
          %1610 = vmatpush1.bf16.msra.mxu0 0
          %1611 = vmatprep.subr.bf16.mxu0 0
          %1612 = vmatpush1.bf16.msra.mxu0 0
          %1613 = vmatprep.subr.bf16.mxu0 0
          %1614 = vmatpush1.bf16.msra.mxu0 0
          %1615 = vmatprep.subr.bf16.mxu0 %v1595
          %1616 = vmatpush1.bf16.msra.mxu0 %v1594
          %1617 = vmatprep.subr.bf16.mxu0 %v1593
          %1618 = vmatpush1.bf16.msra.mxu0 %v1592
          %1619 = vmatprep.subr.bf16.mxu0 0
          %1620 = vmatpush2.bf16.msra.mxu0 0
          %1621 = vmatprep.subr.bf16.mxu0 0
          %1622 = vmatpush2.bf16.msra.mxu0 0
          %1623 = vmatprep.subr.bf16.mxu0 0
          %1624 = vmatpush2.bf16.msra.mxu0 0
          %1625 = vmatprep.subr.bf16.mxu0 0
          %1626 = vmatpush2.bf16.msra.mxu0 0
          %1627 = vmatprep.subr.bf16.mxu0 0
          %1628 = vmatpush2.bf16.msra.mxu0 0
          %1629 = vmatprep.subr.bf16.mxu0 0
          %1630 = vmatpush2.bf16.msra.mxu0 0
          %1631 = vmatprep.subr.bf16.mxu0 0
          %1632 = vmatpush2.bf16.msra.mxu0 0
          %1633 = vmatprep.subr.bf16.mxu0 0
          %1634 = vmatpush2.bf16.msra.mxu0 0
          %1635 = vmatprep.mubr.bf16.mxu0 0
          %1636 = vmatmul.mubr.bf16.gmra.mxu0 %v1601
          %v1637 = vpop.f32.mrf.mxu0
          %v1638 = vadd.f32 %v1573, %v1637
          %v1639 = vpop.f32.mrf.mxu0
          %v1640 = vadd.f32 %v1577, %v1639
          %v1641 = vpop.f32.mrf.mxu0
          %v1642 = vpop.f32.mrf.mxu0
          %1643 = vdwg.mxu0
          %v1644 = vmax.f32 %v1638, 0.0
          %v1645 = vmax.f32 %v1640, 0.0
          %v1646 = vpack.c.bf16 %v1644, %v1644
          %v1647 = vpack.c.bf16 %v1645, %v1645
          %v1648 = vld [vmem:[%s9] sm:$0xf]
          %v1649 = vld [vmem:[%s9 + $0x4] sm:$0xf]
          %v1650 = vld [vmem:[%s9 + $0x8] sm:$0xf]
          %v1651 = vld [vmem:[%s9 + $0xc] sm:$0xf]
          %v1652 = vld [vmem:[%s9 + $0x10] sm:$0xf]
          %v1653 = vld [vmem:[%s9 + $0x14] sm:$0xf]
          %v1654 = vld [vmem:[%s9 + $0x18] sm:$0xf]
          %v1655 = vld [vmem:[%s9 + $0x1c] sm:$0xf]
          %v1656 = vld [vmem:[%s9 + $0x20] sm:$0xf]
          %v1657 = vld [vmem:[%s9 + $0x24] sm:$0xf]
          %v1658 = vld [vmem:[%s9 + $0x28] sm:$0xf]
          %v1659 = vld [vmem:[%s9 + $0x2c] sm:$0xf]
          %v1660 = vld [vmem:[%s9 + $0x30] sm:$0xf]
          %v1661 = vld [vmem:[%s9 + $0x34] sm:$0xf]
          %v1662 = vld [vmem:[%s9 + $0x38] sm:$0xf]
          %v1663 = vld [vmem:[%s9 + $0x3c] sm:$0xf]
          %v1664 = vld [vmem:[%s9 + $0x40] sm:$0xf]
          %v1665 = vld [vmem:[%s9 + $0x44] sm:$0xf]
          %v1666 = vld [vmem:[%s9 + $0x48] sm:$0xf]
          %v1667 = vld [vmem:[%s9 + $0x4c] sm:$0xf]
          %v1668 = vld [vmem:[%s9 + $0x50] sm:$0xf]
          %v1669 = vld [vmem:[%s9 + $0x54] sm:$0xf]
          %v1670 = vld [vmem:[%s9 + $0x58] sm:$0xf]
          %v1671 = vld [vmem:[%s9 + $0x5c] sm:$0xf]
          %v1672 = vld [vmem:[%s9 + $0x60] sm:$0xf]
          %v1673 = vld [vmem:[%s9 + $0x64] sm:$0xf]
          %v1674 = vld [vmem:[%s9 + $0x68] sm:$0xf]
          %v1675 = vld [vmem:[%s9 + $0x6c] sm:$0xf]
          %v1676 = vld [vmem:[%s9 + $0x70] sm:$0xf]
          %v1677 = vld [vmem:[%s9 + $0x74] sm:$0xf]
          %v1678 = vld [vmem:[%s9 + $0x78] sm:$0xf]
          %v1679 = vld [vmem:[%s9 + $0x7c] sm:$0xf]
          %v1680 = vld [vmem:[%s10] sm:$0x1]
          %v1682 = vlaneseq
          %v1683 = vshrl.u32 %v1682, 7
          %v1684 = vsub.s32 0, %v1683
          %v1685 = vrot.slane %v1680, %v1684
          %v1719 = vunpack.c.l.b16 %v1648
          %v1720 = vunpack.c.l.b16 %v1649
          %v1721 = vunpack.c.l.b16 %v1650
          %v1722 = vunpack.c.l.b16 %v1651
          %v1723 = vunpack.c.l.b16 %v1652
          %v1724 = vunpack.c.l.b16 %v1653
          %v1725 = vunpack.c.l.b16 %v1654
          %v1726 = vunpack.c.l.b16 %v1655
          %v1727 = vunpack.c.l.b16 %v1656
          %v1728 = vunpack.c.l.b16 %v1657
          %v1729 = vunpack.c.l.b16 %v1658
          %v1730 = vunpack.c.l.b16 %v1659
          %v1731 = vunpack.c.l.b16 %v1660
          %v1732 = vunpack.c.l.b16 %v1661
          %v1733 = vunpack.c.l.b16 %v1662
          %v1734 = vunpack.c.l.b16 %v1663
          %v1735 = vunpack.c.l.b16 %v1664
          %v1736 = vunpack.c.l.b16 %v1665
          %v1737 = vunpack.c.l.b16 %v1666
          %v1738 = vunpack.c.l.b16 %v1667
          %v1739 = vunpack.c.l.b16 %v1668
          %v1740 = vunpack.c.l.b16 %v1669
          %v1741 = vunpack.c.l.b16 %v1670
          %v1742 = vunpack.c.l.b16 %v1671
          %v1743 = vunpack.c.l.b16 %v1672
          %v1744 = vunpack.c.l.b16 %v1673
          %v1745 = vunpack.c.l.b16 %v1674
          %v1746 = vunpack.c.l.b16 %v1675
          %v1747 = vunpack.c.l.b16 %v1676
          %v1748 = vunpack.c.l.b16 %v1677
          %v1749 = vunpack.c.l.b16 %v1678
          %v1750 = vunpack.c.l.b16 %v1679
          %v1751 = vpack.c.b16 %v1720, %v1719
          %v1752 = vpack.c.b16 %v1722, %v1721
          %v1753 = vpack.c.b16 %v1724, %v1723
          %v1754 = vpack.c.b16 %v1726, %v1725
          %v1755 = vpack.c.b16 %v1728, %v1727
          %v1756 = vpack.c.b16 %v1730, %v1729
          %v1757 = vpack.c.b16 %v1732, %v1731
          %v1758 = vpack.c.b16 %v1734, %v1733
          %v1759 = vpack.c.b16 %v1736, %v1735
          %v1760 = vpack.c.b16 %v1738, %v1737
          %v1761 = vpack.c.b16 %v1740, %v1739
          %v1762 = vpack.c.b16 %v1742, %v1741
          %v1763 = vpack.c.b16 %v1744, %v1743
          %v1764 = vpack.c.b16 %v1746, %v1745
          %v1765 = vpack.c.b16 %v1748, %v1747
          %v1766 = vpack.c.b16 %v1750, %v1749
          %1783 = vmatprep.subr.bf16.mxu0 0
          %1784 = vmatpush1.bf16.msra.mxu0 %v1758
          %1785 = vmatprep.subr.bf16.mxu0 0
          %1786 = vmatpush1.bf16.msra.mxu0 %v1757
          %1787 = vmatprep.subr.bf16.mxu0 0
          %1788 = vmatpush1.bf16.msra.mxu0 %v1756
          %1789 = vmatprep.subr.bf16.mxu0 0
          %1790 = vmatpush1.bf16.msra.mxu0 %v1755
          %1791 = vmatprep.subr.bf16.mxu0 0
          %1792 = vmatpush1.bf16.msra.mxu0 %v1754
          %1793 = vmatprep.subr.bf16.mxu0 0
          %1794 = vmatpush1.bf16.msra.mxu0 %v1753
          %1795 = vmatprep.subr.bf16.mxu0 0
          %1796 = vmatpush1.bf16.msra.mxu0 %v1752
          %1797 = vmatprep.subr.bf16.mxu0 0
          %1798 = vmatpush1.bf16.msra.mxu0 %v1751
          %1799 = vmatprep.subr.bf16.mxu0 0
          %1800 = vmatpush2.bf16.msra.mxu0 %v1766
          %1801 = vmatprep.subr.bf16.mxu0 0
          %1802 = vmatpush2.bf16.msra.mxu0 %v1765
          %1803 = vmatprep.subr.bf16.mxu0 0
          %1804 = vmatpush2.bf16.msra.mxu0 %v1764
          %1805 = vmatprep.subr.bf16.mxu0 0
          %1806 = vmatpush2.bf16.msra.mxu0 %v1763
          %1807 = vmatprep.subr.bf16.mxu0 0
          %1808 = vmatpush2.bf16.msra.mxu0 %v1762
          %1809 = vmatprep.subr.bf16.mxu0 0
          %1810 = vmatpush2.bf16.msra.mxu0 %v1761
          %1811 = vmatprep.subr.bf16.mxu0 0
          %1812 = vmatpush2.bf16.msra.mxu0 %v1760
          %1813 = vmatprep.subr.bf16.mxu0 0
          %1814 = vmatpush2.bf16.msra.mxu0 %v1759
          %1815 = vmatprep.mubr.bf16.mxu0 %v1647
          %1816 = vmatmul.mubr.bf16.gmra.mxu0 %v1646
          %v1817 = vpop.f32.mrf.mxu0
          %v1818 = vadd.f32 %v1685, %v1817
          %v1819 = vpop.f32.mrf.mxu0
          %v1820 = vpop.f32.mrf.mxu0
          %v1821 = vpop.f32.mrf.mxu0
          %1822 = vdwg.mxu0
          %v1823 = vadd.f32 %v1532, %v1818
          %1824 = vst.msk [vmem:[%s549] sm:$0xff] %vm1487, %v1823
        $region92: #{tpu_custom_call.1} parent=79 // pred_fallthru
          _
        %s1825 = sand.u32 %s391, 1
        %s1826 = scalar_lea.sflag [#allocation9], %s1825
        %s1827 = sand.u32 %s391, 1
        %s1828 = smul.addr %s1827, 8
        %s1829 = scalar_lea.vmem [#allocation8], %s1828
        // Predicated region
        $region93: #{tpu_custom_call.1} parent=79 // pred_check
          %p1830 = pneg %p401
        $region94: #{tpu_custom_call.1} parent=79 // pred_check_branch
          %1832 = sbr.rel (%p1830) target = $region96
        $region95: #{tpu_custom_call.1} parent=79 // pred_region
          %s1834 = ssub.s32 128, 128
          %1835 = vsyncadd %s1826, %s1834
          %s1836 = smul.addr %s34, 2
          %s1837 = sadd.s32 %s35, %s1836
          %s1838 = smul.addr %s1837, 128
          %s1839 = scalar_lea.hbm %s15, %s1838
          %s1841 = sshll.u32 %s1829, 4
          %s1842 = int_to_ptr.vmem [resolvable:$true] %s1841
          %1844 = dma.vmem_to_hbm [thread:$0]  %s1842, 128, %s1839, %s1826
        $region96: #{tpu_custom_call.1} parent=79 // pred_fallthru
          _
      $region80: #{tpu_custom_call.1} parent=5 // pred_fallthru
        _
      %p1845 = scmp.le.s32.totalorder 2, %s24
      // Predicated region
      $region97: #{tpu_custom_call.1} parent=5 // pred_check
        %p1846 = pneg %p1845
      $region98: #{tpu_custom_call.1} parent=5 // pred_check_branch
        %1848 = sbr.rel (%p1846) target = $region100
      $region99: #{tpu_custom_call.1} parent=5 // pred_region
        %s1849 = ssub.s32 %s24, 2
        // Predicated region
        $region101: #{tpu_custom_call.1} parent=99 // pred_check
          %p1850 = pneg %p407
        $region102: #{tpu_custom_call.1} parent=99 // pred_check_branch
          %1852 = sbr.rel (%p1850) target = $region104
        $region103: #{tpu_custom_call.1} parent=99 // pred_region
          %s1853 = sand.u32 %s392, 1
          %s1854 = scalar_lea.sflag [#allocation9], %s1853
          %s1855 = sand.u32 %s392, 1
          %s1856 = smul.addr %s1855, 8
          %s1857 = scalar_lea.vmem [#allocation8], %s1856
          %1858 = dma.done %s1854, 128
        $region104: #{tpu_custom_call.1} parent=99 // pred_fallthru
          _
      $region100: #{tpu_custom_call.1} parent=5 // pred_fallthru
        _
    $region6: #{tpu_custom_call.1} parent=1 // loop_footer
      %s28 = sadd.s32 1, %s24
    $region7: #{tpu_custom_call.1} parent=1 // loop_footer_branch
      %23 = sbr.rel target = $region3
    $region8: #{tpu_custom_call.1} parent=1 // loop_exit
      _
    %1859 = vsyncpa [#allocation9], 1
    %s1860 = scalar_lea.sflag [#allocation9], 1
    %1861 = vsyncpa %s1860, 1

</llo_original>
